<compile_context>
chip_gen: v6e
topology: v6e:2x2x1
jax: 0.10.0
libtpu: 0.0.40
codegen_flags: <defaults>
</compile_context>

<pallas_src>
import functools

import jax
import jax.numpy as jnp
from jax.experimental import pallas as pl
from jax.experimental.pallas import tpu as pltpu

LN_EPS = 1e-5


def _round_up(x, m):
    return ((x + m - 1) // m) * m


def _moe_kernel(x_ref, w1g_ref, b1g_ref, w2_ref, b2_ref,
                we_ref, be_ref, expand_ref, collapse_ref, out_ref,
                *, K: int, glu_on: bool):
    """One token tile of the MoE forward; writes the expert-summed (tb, d_out) output."""
    x = x_ref[...].astype(jnp.float32)

    # ---- input LayerNorm (elementwise_affine=False), all elementwise math in f32 ----
    mean = jnp.mean(x, axis=-1, keepdims=True)
    var = jnp.mean((x - mean) ** 2, axis=-1, keepdims=True)
    xn = (x - mean) * jax.lax.rsqrt(var + LN_EPS)
    xn_b = xn.astype(jnp.bfloat16)                      # bf16 MXU operands, f32 accumulate

    # ---- router: fused (w1 | w_glu) projection -> single MXU pass over xn ----
    h = jnp.dot(xn_b, w1g_ref[...], preferred_element_type=jnp.float32) + b1g_ref[...]
    if glu_on:
        Hd = w1g_ref.shape[1] // 2
        h1 = h[:, :Hd] * jax.nn.sigmoid(h[:, Hd:])      # 128-lane-aligned static slices
    else:
        h1 = h
    h1 = jnp.tanh(h1)
    logits = (jnp.dot(h1.astype(jnp.bfloat16), w2_ref[...],
                      preferred_element_type=jnp.float32) + b2_ref[...])

    # softmax over experts (token-choice routing, dim=1)
    lmax = jnp.max(logits, axis=-1, keepdims=True)
    ez = jnp.exp(logits - lmax)
    probs = ez * pl.reciprocal(jnp.sum(ez, axis=-1, keepdims=True), approx=False)

    TB, E = probs.shape

    # ---- top-K membership: iterative max, iota/min tie-break (lowest index wins,
    #      matching lax.top_k / torch.topk).  Requires K < E (asserted in wrapper). ----
    iota_e = jax.lax.broadcasted_iota(jnp.int32, (TB, E), 1)
    work = probs
    sel = jnp.zeros((TB, E), jnp.float32)
    pmax = None
    for kk in range(K):
        mval = jnp.max(work, axis=-1, keepdims=True)
        if kk == 0:
            pmax = mval                                  # top-1 == global max: reuse for renorm
        cand = jnp.where(work == mval, iota_e, E)
        first = jnp.min(cand, axis=-1, keepdims=True)
        onehot = (iota_e == first).astype(jnp.float32)
        sel = sel + onehot
        work = jnp.where(onehot > 0, -jnp.inf, work)

    # ---- renorm: softmax over the K selected probs (max-subtracted; approx recip -> EUP) ----
    g = sel * jnp.exp(probs - pmax)
    gates = g * pl.reciprocal(jnp.sum(g, axis=-1, keepdims=True), approx=True)   # (TB, E)

    # ---- ALL experts in one lane-dense bf16 GEMM: (TB, d_in) @ (d_in, E*d_out) ----
    y = jnp.dot(xn_b, we_ref[...], preferred_element_type=jnp.float32) + be_ref[...]
    # gate expansion (TB,E)->(TB,E*d_out) and expert collapse (TB,E*d_out)->(TB,d_out)
    # via tiny 0/1 MXU matmuls (lane-safe: no XLU shuffles / sub-128-lane reshapes).
    gexp = jnp.dot(gates, expand_ref[...], preferred_element_type=jnp.float32)
    out = jnp.dot(y * gexp, collapse_ref[...], preferred_element_type=jnp.float32)
    # TODO(synk): on v5e, emitting this output in bf16 halves store bytes if the consumer allows.
    out_ref[...] = out.astype(out_ref.dtype)


def moe_wrapper_forward(x, params, *, K: int, glu_on: bool, tile_b: int = 512):
    """MoEWrapper.forward (token-choice, output_type='sum')."""
    w1, b1, wg, bg, w2, b2, we, be = params
    B, d_in = x.shape
    E, _, d_out = we.shape
    H = w1.shape[1]
    assert 1 <= K < E, "top-K loop requires 1 <= K < num_experts"

    # --- host-side weight layout / dtype prep (done once; fused by XLA in real use) ---
    if glu_on:
        w1g = jnp.concatenate([w1, wg], axis=1)          # (d_in, 2H)
        b1g = jnp.concatenate([b1, bg], axis=1)          # (1, 2H)
    else:
        w1g, b1g = w1, b1
    we_flat = jnp.transpose(we, (1, 0, 2)).reshape(d_in, E * d_out)   # (d_in, E*d_out)
    be_flat = be.reshape(1, E * d_out)
    # expand[e, e*d_out + j] = 1 : broadcasts each expert's gate across its d_out lanes
    expand = (jnp.arange(E)[:, None] ==
              (jnp.arange(E * d_out)[None, :] // d_out)).astype(jnp.float32)
    # collapse[e*d_out + j, j] = 1 : sums the gated per-expert groups -> (tb, d_out)
    collapse = (jnp.arange(E * d_out)[:, None] % d_out ==
                jnp.arange(d_out)[None, :]).astype(jnp.float32)

    # bf16 MXU operands (f32 accumulation in-kernel); biases / gating matrices stay f32
    w1g_b = w1g.astype(jnp.bfloat16)
    w2_b = w2.astype(jnp.bfloat16)
    we_b = we_flat.astype(jnp.bfloat16)

    # --- token tiling: big tiles, but guarantee >= 2 grid steps so ("parallel",)
    #     actually shards token tiles across v7x's two TensorCores ---
    tb = min(_round_up(tile_b, 8), _round_up(B, 8))
    if B > 8:
        tb = min(tb, _round_up((B + 1) // 2, 8))
    Bp = _round_up(B, tb)
    if Bp != B:
        x = jnp.pad(x, ((0, Bp - B), (0, 0)))            # zero rows (LN-safe); sliced off below
    grid = (Bp // tb,)

    def resident(shape):
        # constant index_map + single buffer: weights never change across grid steps
        return pl.BlockSpec(shape, lambda i, _n=len(shape): (0,) * _n,
                            pipeline_mode=pl.Buffered(1))

    kernel = functools.partial(_moe_kernel, K=K, glu_on=glu_on)
    out = pl.pallas_call(
        kernel,
        out_shape=jax.ShapeDtypeStruct((Bp, d_out), jnp.float32),
        grid=grid,
        in_specs=[
            pl.BlockSpec((tb, d_in), lambda i: (i, 0)),  # x: tiled + double-buffered
            resident(w1g_b.shape),                        # fused router w1|wg (bf16)
            resident(b1g.shape),
            resident((H, E)),                             # router w2 (bf16)
            resident((1, E)),
            resident((d_in, E * d_out)),                  # fused expert weights (bf16)
            resident((1, E * d_out)),
            resident((E, E * d_out)),                     # gate-expansion matrix
            resident((E * d_out, d_out)),                 # expert-collapse matrix
        ],
        out_specs=pl.BlockSpec((tb, d_out), lambda i: (i, 0)),
        compiler_params=pltpu.CompilerParams(
            dimension_semantics=("parallel",),            # shard token tiles on v7x 2-TC
            vmem_limit_bytes=32 * 1024 * 1024),
    )(x, w1g_b, b1g, w2_b, b2, we_b, be_flat, expand, collapse)

    return out[:B]


def _reference_forward(x, params, *, K: int, glu_on: bool):
    """Pure-JAX reference mirroring the PyTorch forward, with the same bf16-operand /
    f32-accumulate matmul numerics as the kernel."""
    w1, b1, wg, bg, w2, b2, we, be = params
    mean = jnp.mean(x, axis=-1, keepdims=True)
    var = jnp.mean((x - mean) ** 2, axis=-1, keepdims=True)
    xn = (x - mean) / jnp.sqrt(var + LN_EPS)
    xb = xn.astype(jnp.bfloat16)

    h1 = jnp.dot(xb, w1.astype(jnp.bfloat16), preferred_element_type=jnp.float32) + b1
    if glu_on:
        gm = jnp.dot(xb, wg.astype(jnp.bfloat16), preferred_element_type=jnp.float32) + bg
        h1 = h1 * jax.nn.sigmoid(gm)
    h1 = jnp.tanh(h1)
    logits = jnp.dot(h1.astype(jnp.bfloat16), w2.astype(jnp.bfloat16),
                     preferred_element_type=jnp.float32) + b2
    probs = jax.nn.softmax(logits, axis=1)

    ws, ib = jax.lax.top_k(probs, K)              # (B, K)
    nws = jax.nn.softmax(ws, axis=1)              # renorm_sm

    B = x.shape[0]
    E, _, d_out = we.shape
    out = jnp.zeros((B, d_out), jnp.float32)
    for ex in range(E):
        gate = jnp.sum(jnp.where(ib == ex, nws, 0.0), axis=1)            # (B,)
        y = jnp.dot(xb, we[ex].astype(jnp.bfloat16),
                    preferred_element_type=jnp.float32) + be[ex, 0]
        out = out + gate[:, None] * y
    return out


def make_params(key, d_in, d_out, H, E):
    ks = jax.random.split(key, 8)
    s = 0.1
    w1 = s * jax.random.normal(ks[0], (d_in, H), jnp.float32)
    b1 = s * jax.random.normal(ks[1], (1, H), jnp.float32)
    wg = s * jax.random.normal(ks[2], (d_in, H), jnp.float32)
    bg = s * jax.random.normal(ks[3], (1, H), jnp.float32)
    w2 = s * jax.random.normal(ks[4], (H, E), jnp.float32)
    b2 = s * jax.random.normal(ks[5], (1, E), jnp.float32)
    we = s * jax.random.normal(ks[6], (E, d_in, d_out), jnp.float32)
    be = s * jax.random.normal(ks[7], (E, 1, d_out), jnp.float32)
    return (w1, b1, wg, bg, w2, b2, we, be)


if __name__ == "__main__":
    # B=72 is deliberately not a power of two: exercises batch padding AND a 2-step
    # batch grid (tb capped to ceil(B/2) rounded to 8 -> 40), i.e. the "parallel" axis.
    B, D_IN, D_OUT = 72, 32, 32
    H = 128            # router_hidden_dim fixed in MoEWrapper.__init__
    E = 4              # num_experts
    K = 2              # top-K
    GLU_ON = True

    key = jax.random.PRNGKey(0)
    kx, kp = jax.random.split(key)
    x = jax.random.normal(kx, (B, D_IN), jnp.float32)
    params = make_params(kp, D_IN, D_OUT, H, E)

    out = moe_wrapper_forward(x, params, K=K, glu_on=GLU_ON)
    out = jax.block_until_ready(out)

    ref = _reference_forward(x, params, K=K, glu_on=GLU_ON)
    assert out.shape == (B, D_OUT)
    err = jnp.max(jnp.abs(out - ref))
    assert jnp.allclose(out, ref, atol=2e-3, rtol=2e-3), f"max abs err {err}"

    # TODO(synk): additional_input / expert_choice / concat & concat_sum output_type
    # paths are config branches not exercised here (additional_input=None,
    # expert_choice=False, output_type='sum').
    print("KERNEL_OK")
</pallas_src>

<mosaic_0001>
module attributes {stable_mosaic.version = 11 : i64} {
  func.func @_moe_kernel(%arg0: i32, %arg1: memref<40x32xf32, #tpu.memory_space<vmem>>, %arg2: memref<32x256xbf16, #tpu.memory_space<vmem>>, %arg3: memref<1x256xf32, #tpu.memory_space<vmem>>, %arg4: memref<128x4xbf16, #tpu.memory_space<vmem>>, %arg5: memref<1x4xf32, #tpu.memory_space<vmem>>, %arg6: memref<32x128xbf16, #tpu.memory_space<vmem>>, %arg7: memref<1x128xf32, #tpu.memory_space<vmem>>, %arg8: memref<4x128xf32, #tpu.memory_space<vmem>>, %arg9: memref<128x32xf32, #tpu.memory_space<vmem>>, %arg10: memref<40x32xf32, #tpu.memory_space<vmem>>) attributes {dimension_semantics = [#tpu.dimension_semantics<parallel>], iteration_bounds = array<i64: 2>, scalar_prefetch = 0 : i64, scratch_operands = 0 : i64, tpu.core_type = #tpu.core_type<tc>, window_params = [{transform_indices = @transform_0, window_bounds = array<i64: 40, 32>}, {pipeline_mode = #tpu.pipeline_mode<synchronous>, transform_indices = @transform_1, window_bounds = array<i64: 32, 256>}, {pipeline_mode = #tpu.pipeline_mode<synchronous>, transform_indices = @transform_2, window_bounds = array<i64: 1, 256>}, {pipeline_mode = #tpu.pipeline_mode<synchronous>, transform_indices = @transform_3, window_bounds = array<i64: 128, 4>}, {pipeline_mode = #tpu.pipeline_mode<synchronous>, transform_indices = @transform_4, window_bounds = array<i64: 1, 4>}, {pipeline_mode = #tpu.pipeline_mode<synchronous>, transform_indices = @transform_5, window_bounds = array<i64: 32, 128>}, {pipeline_mode = #tpu.pipeline_mode<synchronous>, transform_indices = @transform_6, window_bounds = array<i64: 1, 128>}, {pipeline_mode = #tpu.pipeline_mode<synchronous>, transform_indices = @transform_7, window_bounds = array<i64: 4, 128>}, {pipeline_mode = #tpu.pipeline_mode<synchronous>, transform_indices = @transform_8, window_bounds = array<i64: 128, 32>}, {transform_indices = @transform_9, window_bounds = array<i64: 40, 32>}]} {
    %c0 = arith.constant 0 : index
    %c0_0 = arith.constant 0 : index
    %0 = vector.load %arg1[%c0, %c0_0] : memref<40x32xf32, #tpu.memory_space<vmem>>, vector<40x32xf32>
    %cst = arith.constant dense<0.000000e+00> : vector<40xf32>
    %1 = vector.multi_reduction <add>, %0, %cst [1] : vector<40x32xf32> to vector<40xf32>
    %2 = vector.shape_cast %1 : vector<40xf32> to vector<40x1xf32>
    %cst_1 = arith.constant 3.200000e+01 : f32
    %3 = vector.broadcast %cst_1 : f32 to vector<40x1xf32>
    %4 = arith.divf %2, %3 : vector<40x1xf32>
    %5 = vector.broadcast %4 : vector<40x1xf32> to vector<40x32xf32>
    %6 = arith.subf %0, %5 : vector<40x32xf32>
    %7 = arith.mulf %6, %6 : vector<40x32xf32>
    %cst_2 = arith.constant dense<0.000000e+00> : vector<40xf32>
    %8 = vector.multi_reduction <add>, %7, %cst_2 [1] : vector<40x32xf32> to vector<40xf32>
    %9 = vector.shape_cast %8 : vector<40xf32> to vector<40x1xf32>
    %cst_3 = arith.constant 3.200000e+01 : f32
    %10 = vector.broadcast %cst_3 : f32 to vector<40x1xf32>
    %11 = arith.divf %9, %10 : vector<40x1xf32>
    %12 = vector.broadcast %4 : vector<40x1xf32> to vector<40x32xf32>
    %13 = arith.subf %0, %12 : vector<40x32xf32>
    %cst_4 = arith.constant 9.99999974E-6 : f32
    %14 = vector.broadcast %cst_4 : f32 to vector<40x1xf32>
    %15 = arith.addf %11, %14 : vector<40x1xf32>
    %16 = math.rsqrt %15 : vector<40x1xf32>
    %17 = vector.broadcast %16 : vector<40x1xf32> to vector<40x32xf32>
    %18 = arith.mulf %13, %17 : vector<40x32xf32>
    %19 = arith.truncf %18 : vector<40x32xf32> to vector<40x32xbf16>
    %c0_5 = arith.constant 0 : index
    %c0_6 = arith.constant 0 : index
    %20 = vector.load %arg2[%c0_5, %c0_6] : memref<32x256xbf16, #tpu.memory_space<vmem>>, vector<32x256xbf16>
    %cst_7 = arith.constant dense<0.000000e+00> : vector<40x256xf32>
    %21 = tpu.matmul %19, %20, %cst_7 {dimension_numbers = #tpu.dot_dimension_numbers<[1], [0], [0], [1], [0, 0, 1, 1], [], []>} : vector<40x32xbf16>, vector<32x256xbf16>, vector<40x256xf32> -> vector<40x256xf32>
    %c0_8 = arith.constant 0 : index
    %c0_9 = arith.constant 0 : index
    %22 = vector.load %arg3[%c0_8, %c0_9] : memref<1x256xf32, #tpu.memory_space<vmem>>, vector<1x256xf32>
    %23 = vector.broadcast %22 : vector<1x256xf32> to vector<40x256xf32>
    %24 = arith.addf %21, %23 : vector<40x256xf32>
    %25 = vector.extract_strided_slice %24 {offsets = [0, 0], sizes = [40, 128], strides = [1, 1]} : vector<40x256xf32> to vector<40x128xf32>
    %26 = vector.extract_strided_slice %24 {offsets = [0, 128], sizes = [40, 128], strides = [1, 1]} : vector<40x256xf32> to vector<40x128xf32>
    %27 = arith.negf %26 : vector<40x128xf32>
    %28 = math.exp %27 : vector<40x128xf32>
    %cst_10 = arith.constant 1.000000e+00 : f32
    %29 = vector.broadcast %cst_10 : f32 to vector<40x128xf32>
    %30 = arith.addf %29, %28 : vector<40x128xf32>
    %31 = arith.divf %29, %30 : vector<40x128xf32>
    %32 = arith.mulf %25, %31 : vector<40x128xf32>
    %33 = math.tanh %32 : vector<40x128xf32>
    %34 = arith.truncf %33 : vector<40x128xf32> to vector<40x128xbf16>
    %c0_11 = arith.constant 0 : index
    %c0_12 = arith.constant 0 : index
    %35 = vector.load %arg4[%c0_11, %c0_12] : memref<128x4xbf16, #tpu.memory_space<vmem>>, vector<128x4xbf16>
    %cst_13 = arith.constant dense<0.000000e+00> : vector<40x4xf32>
    %36 = tpu.matmul %34, %35, %cst_13 {dimension_numbers = #tpu.dot_dimension_numbers<[1], [0], [0], [1], [0, 0, 1, 1], [], []>} : vector<40x128xbf16>, vector<128x4xbf16>, vector<40x4xf32> -> vector<40x4xf32>
    %c0_14 = arith.constant 0 : index
    %c0_15 = arith.constant 0 : index
    %37 = vector.load %arg5[%c0_14, %c0_15] : memref<1x4xf32, #tpu.memory_space<vmem>>, vector<1x4xf32>
    %38 = vector.broadcast %37 : vector<1x4xf32> to vector<40x4xf32>
    %39 = arith.addf %36, %38 : vector<40x4xf32>
    %cst_16 = arith.constant dense<0xFF800000> : vector<40xf32>
    %40 = vector.multi_reduction <maximumf>, %39, %cst_16 [1] : vector<40x4xf32> to vector<40xf32>
    %41 = vector.shape_cast %40 : vector<40xf32> to vector<40x1xf32>
    %42 = vector.broadcast %41 : vector<40x1xf32> to vector<40x4xf32>
    %43 = arith.subf %39, %42 : vector<40x4xf32>
    %44 = math.exp %43 : vector<40x4xf32>
    %cst_17 = arith.constant dense<0.000000e+00> : vector<40xf32>
    %45 = vector.multi_reduction <add>, %44, %cst_17 [1] : vector<40x4xf32> to vector<40xf32>
    %46 = vector.shape_cast %45 : vector<40xf32> to vector<40x1xf32>
    %47 = tpu.reciprocal %46 : vector<40x1xf32> -> vector<40x1xf32>
    %48 = vector.broadcast %47 : vector<40x1xf32> to vector<40x4xf32>
    %49 = arith.mulf %44, %48 : vector<40x4xf32>
    %50 = tpu.iota {dimensions = array<i32: 1>} : vector<40x4xi32>
    %cst_18 = arith.constant 0.000000e+00 : f32
    %51 = vector.broadcast %cst_18 : f32 to vector<40x4xf32>
    %cst_19 = arith.constant dense<0xFF800000> : vector<40xf32>
    %52 = vector.multi_reduction <maximumf>, %49, %cst_19 [1] : vector<40x4xf32> to vector<40xf32>
    %53 = vector.shape_cast %52 : vector<40xf32> to vector<40x1xf32>
    %54 = vector.broadcast %53 : vector<40x1xf32> to vector<40x4xf32>
    %55 = arith.cmpf oeq, %49, %54 : vector<40x4xf32>
    %c4_i32 = arith.constant 4 : i32
    %56 = vector.broadcast %c4_i32 : i32 to vector<40x4xi32>
    %57 = arith.select %55, %50, %56 : vector<40x4xi1>, vector<40x4xi32>
    %cst_20 = arith.constant dense<2147483647> : vector<40xi32>
    %58 = vector.multi_reduction <minsi>, %57, %cst_20 [1] : vector<40x4xi32> to vector<40xi32>
    %59 = vector.shape_cast %58 : vector<40xi32> to vector<40x1xi32>
    %60 = vector.broadcast %59 : vector<40x1xi32> to vector<40x4xi32>
    %61 = arith.cmpi eq, %50, %60 : vector<40x4xi32>
    %62 = arith.extui %61 : vector<40x4xi1> to vector<40x4xi32>
    %63 = arith.sitofp %62 : vector<40x4xi32> to vector<40x4xf32>
    %64 = arith.addf %51, %63 : vector<40x4xf32>
    %cst_21 = arith.constant 0.000000e+00 : f32
    %65 = vector.broadcast %cst_21 : f32 to vector<40x4xf32>
    %66 = arith.cmpf ogt, %63, %65 : vector<40x4xf32>
    %cst_22 = arith.constant 0xFF800000 : f32
    %67 = vector.broadcast %cst_22 : f32 to vector<40x4xf32>
    %68 = arith.select %66, %67, %49 : vector<40x4xi1>, vector<40x4xf32>
    %cst_23 = arith.constant dense<0xFF800000> : vector<40xf32>
    %69 = vector.multi_reduction <maximumf>, %68, %cst_23 [1] : vector<40x4xf32> to vector<40xf32>
    %70 = vector.shape_cast %69 : vector<40xf32> to vector<40x1xf32>
    %71 = vector.broadcast %70 : vector<40x1xf32> to vector<40x4xf32>
    %72 = arith.cmpf oeq, %68, %71 : vector<40x4xf32>
    %c4_i32_24 = arith.constant 4 : i32
    %73 = vector.broadcast %c4_i32_24 : i32 to vector<40x4xi32>
    %74 = arith.select %72, %50, %73 : vector<40x4xi1>, vector<40x4xi32>
    %cst_25 = arith.constant dense<2147483647> : vector<40xi32>
    %75 = vector.multi_reduction <minsi>, %74, %cst_25 [1] : vector<40x4xi32> to vector<40xi32>
    %76 = vector.shape_cast %75 : vector<40xi32> to vector<40x1xi32>
    %77 = vector.broadcast %76 : vector<40x1xi32> to vector<40x4xi32>
    %78 = arith.cmpi eq, %50, %77 : vector<40x4xi32>
    %79 = arith.extui %78 : vector<40x4xi1> to vector<40x4xi32>
    %80 = arith.sitofp %79 : vector<40x4xi32> to vector<40x4xf32>
    %81 = arith.addf %64, %80 : vector<40x4xf32>
    %82 = vector.broadcast %53 : vector<40x1xf32> to vector<40x4xf32>
    %83 = arith.subf %49, %82 : vector<40x4xf32>
    %84 = math.exp %83 : vector<40x4xf32>
    %85 = arith.mulf %81, %84 : vector<40x4xf32>
    %cst_26 = arith.constant dense<0.000000e+00> : vector<40xf32>
    %86 = vector.multi_reduction <add>, %85, %cst_26 [1] : vector<40x4xf32> to vector<40xf32>
    %87 = vector.shape_cast %86 : vector<40xf32> to vector<40x1xf32>
    %88 = tpu.reciprocal %87 {approx = true} : vector<40x1xf32> -> vector<40x1xf32>
    %89 = vector.broadcast %88 : vector<40x1xf32> to vector<40x4xf32>
    %90 = arith.mulf %85, %89 : vector<40x4xf32>
    %c0_27 = arith.constant 0 : index
    %c0_28 = arith.constant 0 : index
    %91 = vector.load %arg6[%c0_27, %c0_28] : memref<32x128xbf16, #tpu.memory_space<vmem>>, vector<32x128xbf16>
    %cst_29 = arith.constant dense<0.000000e+00> : vector<40x128xf32>
    %92 = tpu.matmul %19, %91, %cst_29 {dimension_numbers = #tpu.dot_dimension_numbers<[1], [0], [0], [1], [0, 0, 1, 1], [], []>} : vector<40x32xbf16>, vector<32x128xbf16>, vector<40x128xf32> -> vector<40x128xf32>
    %c0_30 = arith.constant 0 : index
    %c0_31 = arith.constant 0 : index
    %93 = vector.load %arg7[%c0_30, %c0_31] : memref<1x128xf32, #tpu.memory_space<vmem>>, vector<1x128xf32>
    %94 = vector.broadcast %93 : vector<1x128xf32> to vector<40x128xf32>
    %95 = arith.addf %92, %94 : vector<40x128xf32>
    %c0_32 = arith.constant 0 : index
    %c0_33 = arith.constant 0 : index
    %96 = vector.load %arg8[%c0_32, %c0_33] : memref<4x128xf32, #tpu.memory_space<vmem>>, vector<4x128xf32>
    %cst_34 = arith.constant dense<0.000000e+00> : vector<40x128xf32>
    %97 = tpu.matmul %90, %96, %cst_34 {dimension_numbers = #tpu.dot_dimension_numbers<[1], [0], [0], [1], [0, 0, 1, 1], [], []>} : vector<40x4xf32>, vector<4x128xf32>, vector<40x128xf32> -> vector<40x128xf32>
    %98 = arith.mulf %95, %97 : vector<40x128xf32>
    %c0_35 = arith.constant 0 : index
    %c0_36 = arith.constant 0 : index
    %99 = vector.load %arg9[%c0_35, %c0_36] : memref<128x32xf32, #tpu.memory_space<vmem>>, vector<128x32xf32>
    %cst_37 = arith.constant dense<0.000000e+00> : vector<40x32xf32>
    %100 = tpu.matmul %98, %99, %cst_37 {dimension_numbers = #tpu.dot_dimension_numbers<[1], [0], [0], [1], [0, 0, 1, 1], [], []>} : vector<40x128xf32>, vector<128x32xf32>, vector<40x32xf32> -> vector<40x32xf32>
    %c0_38 = arith.constant 0 : index
    %c0_39 = arith.constant 0 : index
    %101 = vector.load %arg10[%c0_38, %c0_39] : memref<40x32xf32, #tpu.memory_space<vmem>>, vector<40x32xf32>
    tpu.vector_store %arg10[%c0_38, %c0_39], %100 {strides = array<i32>} : memref<40x32xf32, #tpu.memory_space<vmem>>, vector<40x32xf32>,
    return
  }
  func.func @transform_0(%arg0: i32) -> (i32, i32) {
    %c0_i32 = arith.constant 0 : i32
    %c0_i32_0 = arith.constant 0 : i32
    return %arg0, %c0_i32 : i32, i32
  }
  func.func @transform_1(%arg0: i32) -> (i32, i32) {
    %c0_i32 = arith.constant 0 : i32
    %c0_i32_0 = arith.constant 0 : i32
    %c0_i32_1 = arith.constant 0 : i32
    return %c0_i32, %c0_i32_0 : i32, i32
  }
  func.func @transform_2(%arg0: i32) -> (i32, i32) {
    %c0_i32 = arith.constant 0 : i32
    %c0_i32_0 = arith.constant 0 : i32
    %c0_i32_1 = arith.constant 0 : i32
    return %c0_i32, %c0_i32_0 : i32, i32
  }
  func.func @transform_3(%arg0: i32) -> (i32, i32) {
    %c0_i32 = arith.constant 0 : i32
    %c0_i32_0 = arith.constant 0 : i32
    %c0_i32_1 = arith.constant 0 : i32
    return %c0_i32, %c0_i32_0 : i32, i32
  }
  func.func @transform_4(%arg0: i32) -> (i32, i32) {
    %c0_i32 = arith.constant 0 : i32
    %c0_i32_0 = arith.constant 0 : i32
    %c0_i32_1 = arith.constant 0 : i32
    return %c0_i32, %c0_i32_0 : i32, i32
  }
  func.func @transform_5(%arg0: i32) -> (i32, i32) {
    %c0_i32 = arith.constant 0 : i32
    %c0_i32_0 = arith.constant 0 : i32
    %c0_i32_1 = arith.constant 0 : i32
    return %c0_i32, %c0_i32_0 : i32, i32
  }
  func.func @transform_6(%arg0: i32) -> (i32, i32) {
    %c0_i32 = arith.constant 0 : i32
    %c0_i32_0 = arith.constant 0 : i32
    %c0_i32_1 = arith.constant 0 : i32
    return %c0_i32, %c0_i32_0 : i32, i32
  }
  func.func @transform_7(%arg0: i32) -> (i32, i32) {
    %c0_i32 = arith.constant 0 : i32
    %c0_i32_0 = arith.constant 0 : i32
    %c0_i32_1 = arith.constant 0 : i32
    return %c0_i32, %c0_i32_0 : i32, i32
  }
  func.func @transform_8(%arg0: i32) -> (i32, i32) {
    %c0_i32 = arith.constant 0 : i32
    %c0_i32_0 = arith.constant 0 : i32
    %c0_i32_1 = arith.constant 0 : i32
    return %c0_i32, %c0_i32_0 : i32, i32
  }
  func.func @transform_9(%arg0: i32) -> (i32, i32) {
    %c0_i32 = arith.constant 0 : i32
    %c0_i32_0 = arith.constant 0 : i32
    return %arg0, %c0_i32 : i32, i32
  }
}

</mosaic_0001>

<llo_original>
// kernel: tpu_custom_call.1
$region0: #{tpu_custom_call.1}
  #allocation0 [shape = 'u32[]', space=smem, size = 0x4, offset = 0x4, fixed_abs, tag = 'smem constant byte address 0x4 - core index']
  #allocation1 [shape = 'u32[144,128]{1,0:T(1,128)}', space=vmem, size = 0x12000, scoped, tag = 'internal scratch']
  %s0 = inlined_call_operand.vmem [shape: f32[80,32], index: 0, kind: input, shape index: {}]
  %s1 = inlined_call_operand.vmem [shape: bf16[32,256], index: 1, kind: input, shape index: {}]
  %s2 = inlined_call_operand.vmem [shape: f32[1,256], index: 2, kind: input, shape index: {}]
  %s3 = inlined_call_operand.vmem [shape: bf16[128,4], index: 3, kind: input, shape index: {}]
  %s4 = inlined_call_operand.vmem [shape: f32[1,4], index: 4, kind: input, shape index: {}]
  %s5 = inlined_call_operand.vmem [shape: bf16[32,128], index: 5, kind: input, shape index: {}]
  %s6 = inlined_call_operand.vmem [shape: f32[1,128], index: 6, kind: input, shape index: {}]
  %s7 = inlined_call_operand.vmem [shape: f32[4,128], index: 7, kind: input, shape index: {}]
  %s8 = inlined_call_operand.vmem [shape: f32[128,32], index: 8, kind: input, shape index: {}]
  %s9 = inlined_call_operand.vmem [shape: f32[80,32], index: 9, kind: output, shape index: {}]
  %s10 = sld [smem:[#allocation0]]
  $region69: #{tpu_custom_call.1} parent=0
    _
  %s12 = ssub.s32 1, %s10
  %s13 = scalar_select 0, %s12, %s10
  loop: start=0, step=1, limit=4
  $region2: #{tpu_custom_call.1} parent=0 // loop_pre_header
    _
  $region3: #{tpu_custom_call.1} parent=0 // loop_header
    %s15 = sphi 0, %s19
    %p16 = scmp.ge.s32.totalorder %s15, 4
    %s25 = sphi 0, %s27
    %s28 = sphi 0, %s25
    %s29 = sphi 0, %s28
    %s45 = sphi 0, %s29
    %s49 = sphi 0, %s49
    %s51 = sphi 0, %s49
    %s52 = sphi 0, %s51
    %s66 = sphi 0, %s52
    %s70 = sphi 0, %s70
    %s72 = sphi 0, %s70
    %s73 = sphi 0, %s72
    %s87 = sphi 0, %s73
    %s91 = sphi 0, %s91
    %s93 = sphi 0, %s91
    %s94 = sphi 0, %s93
    %s108 = sphi 0, %s94
    %s112 = sphi 0, %s112
    %s114 = sphi 0, %s112
    %s115 = sphi 0, %s114
    %s129 = sphi 0, %s115
    %s133 = sphi 0, %s133
    %s135 = sphi 0, %s133
    %s136 = sphi 0, %s135
    %s150 = sphi 0, %s136
    %s154 = sphi 0, %s154
    %s156 = sphi 0, %s154
    %s157 = sphi 0, %s156
    %s171 = sphi 0, %s157
    %s175 = sphi 0, %s175
    %s177 = sphi 0, %s175
    %s178 = sphi 0, %s177
    %s192 = sphi 0, %s178
    %s196 = sphi 0, %s196
    %s198 = sphi 0, %s196
    %s199 = sphi 0, %s198
    %s213 = sphi 0, %s199
    %s219 = sphi 0, %s221
    %s222 = sphi 0, %s219
    %s223 = sphi 0, %s222
    %s239 = sphi 0, %s223
  $region4: #{tpu_custom_call.1} parent=0 // loop_header_branch
    %18 = sbr.rel (%p16) target = $region8
  $region5: #{tpu_custom_call.1} parent=0 // loop_body
    %s20 = ssub.s32 %s15, 1
    %s21 = ssub.s32 %s15, 2
    %s22 = sadd.s32 %s15, 1
    %s23 = ssub.s32 %s15, %s22
    %p24 = scmp.eq.s32.totalorder %s23, 0
    %s26 = sadd.s32 %s25, 1
    %s27 = scalar_select %p24, %s25, %s26
    %p30 = pneg %p24
    %p31 = scmp.eq.s32.totalorder %s15, 1
    %p32 = por %p30, %p31
    %p33 = scmp.ne.s32.totalorder %s25, %s28
    %p34 = scmp.eq.s32.totalorder %s15, 0
    %p35 = por %p33, %p34
    %p36 = scmp.ne.s32.totalorder %s25, %s28
    %p37 = scmp.eq.s32.totalorder %s20, 1
    %p38 = por %p36, %p37
    %p39 = scmp.ne.s32.totalorder %s28, %s29
    %p40 = scmp.eq.s32.totalorder %s20, 0
    %p41 = por %p39, %p40
    %p42 = scmp.ne.s32.totalorder %s28, %s29
    %p43 = scmp.eq.s32.totalorder %s21, 1
    %p44 = por %p42, %p43
    %p46 = scmp.ne.s32.totalorder %s29, %s45
    %p47 = scmp.eq.s32.totalorder %s21, 0
    %p48 = por %p46, %p47
    %s50 = sadd.s32 %s49, 1
    %p53 = scmp.eq.s32.totalorder %s15, 1
    %p54 = scmp.ne.s32.totalorder %s49, %s51
    %p55 = scmp.eq.s32.totalorder %s15, 0
    %p56 = por %p54, %p55
    %p57 = scmp.ne.s32.totalorder %s49, %s51
    %p58 = scmp.eq.s32.totalorder %s20, 1
    %p59 = por %p57, %p58
    %p60 = scmp.ne.s32.totalorder %s51, %s52
    %p61 = scmp.eq.s32.totalorder %s20, 0
    %p62 = por %p60, %p61
    %p63 = scmp.ne.s32.totalorder %s51, %s52
    %p64 = scmp.eq.s32.totalorder %s21, 1
    %p65 = por %p63, %p64
    %p67 = scmp.ne.s32.totalorder %s52, %s66
    %p68 = scmp.eq.s32.totalorder %s21, 0
    %p69 = por %p67, %p68
    %s71 = sadd.s32 %s70, 1
    %p74 = scmp.eq.s32.totalorder %s15, 1
    %p75 = scmp.ne.s32.totalorder %s70, %s72
    %p76 = scmp.eq.s32.totalorder %s15, 0
    %p77 = por %p75, %p76
    %p78 = scmp.ne.s32.totalorder %s70, %s72
    %p79 = scmp.eq.s32.totalorder %s20, 1
    %p80 = por %p78, %p79
    %p81 = scmp.ne.s32.totalorder %s72, %s73
    %p82 = scmp.eq.s32.totalorder %s20, 0
    %p83 = por %p81, %p82
    %p84 = scmp.ne.s32.totalorder %s72, %s73
    %p85 = scmp.eq.s32.totalorder %s21, 1
    %p86 = por %p84, %p85
    %p88 = scmp.ne.s32.totalorder %s73, %s87
    %p89 = scmp.eq.s32.totalorder %s21, 0
    %p90 = por %p88, %p89
    %s92 = sadd.s32 %s91, 1
    %p95 = scmp.eq.s32.totalorder %s15, 1
    %p96 = scmp.ne.s32.totalorder %s91, %s93
    %p97 = scmp.eq.s32.totalorder %s15, 0
    %p98 = por %p96, %p97
    %p99 = scmp.ne.s32.totalorder %s91, %s93
    %p100 = scmp.eq.s32.totalorder %s20, 1
    %p101 = por %p99, %p100
    %p102 = scmp.ne.s32.totalorder %s93, %s94
    %p103 = scmp.eq.s32.totalorder %s20, 0
    %p104 = por %p102, %p103
    %p105 = scmp.ne.s32.totalorder %s93, %s94
    %p106 = scmp.eq.s32.totalorder %s21, 1
    %p107 = por %p105, %p106
    %p109 = scmp.ne.s32.totalorder %s94, %s108
    %p110 = scmp.eq.s32.totalorder %s21, 0
    %p111 = por %p109, %p110
    %s113 = sadd.s32 %s112, 1
    %p116 = scmp.eq.s32.totalorder %s15, 1
    %p117 = scmp.ne.s32.totalorder %s112, %s114
    %p118 = scmp.eq.s32.totalorder %s15, 0
    %p119 = por %p117, %p118
    %p120 = scmp.ne.s32.totalorder %s112, %s114
    %p121 = scmp.eq.s32.totalorder %s20, 1
    %p122 = por %p120, %p121
    %p123 = scmp.ne.s32.totalorder %s114, %s115
    %p124 = scmp.eq.s32.totalorder %s20, 0
    %p125 = por %p123, %p124
    %p126 = scmp.ne.s32.totalorder %s114, %s115
    %p127 = scmp.eq.s32.totalorder %s21, 1
    %p128 = por %p126, %p127
    %p130 = scmp.ne.s32.totalorder %s115, %s129
    %p131 = scmp.eq.s32.totalorder %s21, 0
    %p132 = por %p130, %p131
    %s134 = sadd.s32 %s133, 1
    %p137 = scmp.eq.s32.totalorder %s15, 1
    %p138 = scmp.ne.s32.totalorder %s133, %s135
    %p139 = scmp.eq.s32.totalorder %s15, 0
    %p140 = por %p138, %p139
    %p141 = scmp.ne.s32.totalorder %s133, %s135
    %p142 = scmp.eq.s32.totalorder %s20, 1
    %p143 = por %p141, %p142
    %p144 = scmp.ne.s32.totalorder %s135, %s136
    %p145 = scmp.eq.s32.totalorder %s20, 0
    %p146 = por %p144, %p145
    %p147 = scmp.ne.s32.totalorder %s135, %s136
    %p148 = scmp.eq.s32.totalorder %s21, 1
    %p149 = por %p147, %p148
    %p151 = scmp.ne.s32.totalorder %s136, %s150
    %p152 = scmp.eq.s32.totalorder %s21, 0
    %p153 = por %p151, %p152
    %s155 = sadd.s32 %s154, 1
    %p158 = scmp.eq.s32.totalorder %s15, 1
    %p159 = scmp.ne.s32.totalorder %s154, %s156
    %p160 = scmp.eq.s32.totalorder %s15, 0
    %p161 = por %p159, %p160
    %p162 = scmp.ne.s32.totalorder %s154, %s156
    %p163 = scmp.eq.s32.totalorder %s20, 1
    %p164 = por %p162, %p163
    %p165 = scmp.ne.s32.totalorder %s156, %s157
    %p166 = scmp.eq.s32.totalorder %s20, 0
    %p167 = por %p165, %p166
    %p168 = scmp.ne.s32.totalorder %s156, %s157
    %p169 = scmp.eq.s32.totalorder %s21, 1
    %p170 = por %p168, %p169
    %p172 = scmp.ne.s32.totalorder %s157, %s171
    %p173 = scmp.eq.s32.totalorder %s21, 0
    %p174 = por %p172, %p173
    %s176 = sadd.s32 %s175, 1
    %p179 = scmp.eq.s32.totalorder %s15, 1
    %p180 = scmp.ne.s32.totalorder %s175, %s177
    %p181 = scmp.eq.s32.totalorder %s15, 0
    %p182 = por %p180, %p181
    %p183 = scmp.ne.s32.totalorder %s175, %s177
    %p184 = scmp.eq.s32.totalorder %s20, 1
    %p185 = por %p183, %p184
    %p186 = scmp.ne.s32.totalorder %s177, %s178
    %p187 = scmp.eq.s32.totalorder %s20, 0
    %p188 = por %p186, %p187
    %p189 = scmp.ne.s32.totalorder %s177, %s178
    %p190 = scmp.eq.s32.totalorder %s21, 1
    %p191 = por %p189, %p190
    %p193 = scmp.ne.s32.totalorder %s178, %s192
    %p194 = scmp.eq.s32.totalorder %s21, 0
    %p195 = por %p193, %p194
    %s197 = sadd.s32 %s196, 1
    %p200 = scmp.eq.s32.totalorder %s15, 1
    %p201 = scmp.ne.s32.totalorder %s196, %s198
    %p202 = scmp.eq.s32.totalorder %s15, 0
    %p203 = por %p201, %p202
    %p204 = scmp.ne.s32.totalorder %s196, %s198
    %p205 = scmp.eq.s32.totalorder %s20, 1
    %p206 = por %p204, %p205
    %p207 = scmp.ne.s32.totalorder %s198, %s199
    %p208 = scmp.eq.s32.totalorder %s20, 0
    %p209 = por %p207, %p208
    %p210 = scmp.ne.s32.totalorder %s198, %s199
    %p211 = scmp.eq.s32.totalorder %s21, 1
    %p212 = por %p210, %p211
    %p214 = scmp.ne.s32.totalorder %s199, %s213
    %p215 = scmp.eq.s32.totalorder %s21, 0
    %p216 = por %p214, %p215
    %s217 = ssub.s32 %s15, %s22
    %p218 = scmp.eq.s32.totalorder %s217, 0
    %s220 = sadd.s32 %s219, 1
    %s221 = scalar_select %p218, %s219, %s220
    %p224 = pneg %p218
    %p225 = scmp.eq.s32.totalorder %s15, 1
    %p226 = por %p224, %p225
    %p227 = scmp.ne.s32.totalorder %s219, %s222
    %p228 = scmp.eq.s32.totalorder %s15, 0
    %p229 = por %p227, %p228
    %p230 = scmp.ne.s32.totalorder %s219, %s222
    %p231 = scmp.eq.s32.totalorder %s20, 1
    %p232 = por %p230, %p231
    %p233 = scmp.ne.s32.totalorder %s222, %s223
    %p234 = scmp.eq.s32.totalorder %s20, 0
    %p235 = por %p233, %p234
    %p236 = scmp.ne.s32.totalorder %s222, %s223
    %p237 = scmp.eq.s32.totalorder %s21, 1
    %p238 = por %p236, %p237
    %p240 = scmp.ne.s32.totalorder %s223, %s239
    %p241 = scmp.eq.s32.totalorder %s21, 0
    %p242 = por %p240, %p241
    %p243 = scmp.le.s32.totalorder 1, %s15
    %p244 = scmp.lt.s32.totalorder %s15, 3
    %p245 = pnand %p243, %p244
    %p246 = pneg %p245
    // Predicated region
    $region9: #{tpu_custom_call.1} parent=5 // pred_check
      _
    $region10: #{tpu_custom_call.1} parent=5 // pred_check_branch
      %248 = sbr.rel (%p245) target = $region12
    $region11: #{tpu_custom_call.1} parent=5 // pred_region
      %s249 = ssub.s32 %s15, 1
      // Predicated region
      $region13: #{tpu_custom_call.1} parent=11 // pred_check
        %p250 = pneg %p62
      $region14: #{tpu_custom_call.1} parent=11 // pred_check_branch
        %252 = sbr.rel (%p250) target = $region16
      $region15: #{tpu_custom_call.1} parent=11 // pred_region
        _
      $region16: #{tpu_custom_call.1} parent=11 // pred_fallthru
        _
      // Predicated region
      $region17: #{tpu_custom_call.1} parent=11 // pred_check
        %p253 = pneg %p83
      $region18: #{tpu_custom_call.1} parent=11 // pred_check_branch
        %255 = sbr.rel (%p253) target = $region20
      $region19: #{tpu_custom_call.1} parent=11 // pred_region
        _
      $region20: #{tpu_custom_call.1} parent=11 // pred_fallthru
        _
      // Predicated region
      $region21: #{tpu_custom_call.1} parent=11 // pred_check
        %p256 = pneg %p104
      $region22: #{tpu_custom_call.1} parent=11 // pred_check_branch
        %258 = sbr.rel (%p256) target = $region24
      $region23: #{tpu_custom_call.1} parent=11 // pred_region
        _
      $region24: #{tpu_custom_call.1} parent=11 // pred_fallthru
        _
      // Predicated region
      $region25: #{tpu_custom_call.1} parent=11 // pred_check
        %p259 = pneg %p125
      $region26: #{tpu_custom_call.1} parent=11 // pred_check_branch
        %261 = sbr.rel (%p259) target = $region28
      $region27: #{tpu_custom_call.1} parent=11 // pred_region
        _
      $region28: #{tpu_custom_call.1} parent=11 // pred_fallthru
        _
      // Predicated region
      $region29: #{tpu_custom_call.1} parent=11 // pred_check
        %p262 = pneg %p146
      $region30: #{tpu_custom_call.1} parent=11 // pred_check_branch
        %264 = sbr.rel (%p262) target = $region32
      $region31: #{tpu_custom_call.1} parent=11 // pred_region
        _
      $region32: #{tpu_custom_call.1} parent=11 // pred_fallthru
        _
      // Predicated region
      $region33: #{tpu_custom_call.1} parent=11 // pred_check
        %p265 = pneg %p167
      $region34: #{tpu_custom_call.1} parent=11 // pred_check_branch
        %267 = sbr.rel (%p265) target = $region36
      $region35: #{tpu_custom_call.1} parent=11 // pred_region
        _
      $region36: #{tpu_custom_call.1} parent=11 // pred_fallthru
        _
      // Predicated region
      $region37: #{tpu_custom_call.1} parent=11 // pred_check
        %p268 = pneg %p188
      $region38: #{tpu_custom_call.1} parent=11 // pred_check_branch
        %270 = sbr.rel (%p268) target = $region40
      $region39: #{tpu_custom_call.1} parent=11 // pred_region
        _
      $region40: #{tpu_custom_call.1} parent=11 // pred_fallthru
        _
      // Predicated region
      $region41: #{tpu_custom_call.1} parent=11 // pred_check
        %p271 = pneg %p209
      $region42: #{tpu_custom_call.1} parent=11 // pred_check_branch
        %273 = sbr.rel (%p271) target = $region44
      $region43: #{tpu_custom_call.1} parent=11 // pred_region
        _
      $region44: #{tpu_custom_call.1} parent=11 // pred_fallthru
        _
    $region12: #{tpu_custom_call.1} parent=5 // pred_fallthru
      _
    %p274 = scmp.lt.s32.totalorder %s15, 2
    // Predicated region
    $region45: #{tpu_custom_call.1} parent=5 // pred_check
      %p275 = pneg %p274
    $region46: #{tpu_custom_call.1} parent=5 // pred_check_branch
      %277 = sbr.rel (%p275) target = $region48
    $region47: #{tpu_custom_call.1} parent=5 // pred_region
      // Predicated region
      $region49: #{tpu_custom_call.1} parent=47 // pred_check
        %p278 = pneg %p35
      $region50: #{tpu_custom_call.1} parent=47 // pred_check_branch
        %280 = sbr.rel (%p278) target = $region52
      $region51: #{tpu_custom_call.1} parent=47 // pred_region
        %s281 = smul.u32 5, %s15
        %p282 = scmp.lt.s32.totalorder %s281, 9
        %s283 = scalar_select %p282, %s281, 9
        %s284 = smul.addr %s283, 8
        %s285 = scalar_lea.vmem %s0, %s284
        %s286 = smul.u32 5, %s15
      $region52: #{tpu_custom_call.1} parent=47 // pred_fallthru
        _
    $region48: #{tpu_custom_call.1} parent=5 // pred_fallthru
      _
    %p287 = scmp.le.s32.totalorder 1, %s15
    %p288 = scmp.lt.s32.totalorder %s15, 3
    %p289 = pnand %p287, %p288
    %p290 = pneg %p289
    // Predicated region
    $region53: #{tpu_custom_call.1} parent=5 // pred_check
      _
    $region54: #{tpu_custom_call.1} parent=5 // pred_check_branch
      %292 = sbr.rel (%p289) target = $region56
    $region55: #{tpu_custom_call.1} parent=5 // pred_region
      %s293 = ssub.s32 %s15, 1
      %s294 = smul.u32 5, %s20
      %p295 = scmp.lt.s32.totalorder %s294, 9
      %s296 = scalar_select %p295, %s294, 9
      %s297 = smul.addr %s296, 8
      %s298 = scalar_lea.vmem %s0, %s297
      %p299 = pneg %p41
      %p300 = pneg %p38
      %p301 = pneg %p62
      %p302 = pneg %p59
      %p303 = pneg %p83
      %p304 = pneg %p80
      %p305 = pneg %p104
      %p306 = pneg %p101
      %p307 = pneg %p125
      %p308 = pneg %p122
      %p309 = pneg %p146
      %p310 = pneg %p143
      %p311 = pneg %p167
      %p312 = pneg %p164
      %p313 = pneg %p188
      %p314 = pneg %p185
      %p315 = pneg %p209
      %p316 = pneg %p206
      %p317 = pneg %p235
      %p318 = pneg %p232
      %s319 = smul.u32 5, %s20
      %p320 = scmp.lt.s32.totalorder %s319, 9
      %s321 = scalar_select %p320, %s319, 9
      %s322 = smul.addr %s321, 8
      %s323 = scalar_lea.vmem %s9, %s322
      %s324 = smul.u32 5, %s20
      %p325 = scmp.lt.s32.totalorder %s324, 9
      %s326 = scalar_select %p325, %s324, 9
      %s327 = smul.addr %s326, 8
      %s328 = scalar_lea.vmem %s0, %s327
      %s329 = smul.u32 5, %s20
      %s330 = smul.u32 5, %s20
      %p331 = scmp.lt.s32.totalorder %s330, 9
      %s332 = scalar_select %p331, %s330, 9
      %s333 = smul.addr %s332, 8
      %s334 = scalar_lea.vmem %s9, %s333
      %s335 = smul.u32 5, %s20
      %v337 = vld [vmem:[%s328] sm:$0xff]
      %v338 = vld [vmem:[%s328 + $0x8] sm:$0xff]
      %v339 = vld [vmem:[%s328 + $0x10] sm:$0xff]
      %v340 = vld [vmem:[%s328 + $0x18] sm:$0xff]
      %v341 = vld [vmem:[%s328 + $0x20] sm:$0xff]
      %vm342 = vcmask 261120
      %v343 = vsel %vm342, %v337, 0.0
      %344 = vadd.xlane.f32.xlu0 %v343
      %v345 = vpop.xlane.xlu0 %344
      %v346 = vsel %vm342, %v338, 0.0
      %347 = vadd.xlane.f32.xlu0 %v346
      %v348 = vpop.xlane.xlu0 %347
      %v349 = vsel %vm342, %v339, 0.0
      %350 = vadd.xlane.f32.xlu0 %v349
      %v351 = vpop.xlane.xlu0 %350
      %v352 = vsel %vm342, %v340, 0.0
      %353 = vadd.xlane.f32.xlu0 %v352
      %v354 = vpop.xlane.xlu0 %353
      %v355 = vsel %vm342, %v341, 0.0
      %356 = vadd.xlane.f32.xlu0 %v355
      %v357 = vpop.xlane.xlu0 %356
      %v358 = vrcp.pop 32.0
      %v359 = vmul.f32 %v345, %v358
      %v360 = vmul.f32 %v348, %v358
      %v361 = vmul.f32 %v351, %v358
      %v362 = vmul.f32 %v354, %v358
      %v363 = vmul.f32 %v357, %v358
      %v364 = vsub.f32 %v337, %v359
      %v365 = vsub.f32 %v338, %v360
      %v366 = vsub.f32 %v339, %v361
      %v367 = vsub.f32 %v340, %v362
      %v368 = vsub.f32 %v341, %v363
      %v369 = vmul.f32 %v364, %v364
      %v370 = vmul.f32 %v365, %v365
      %v371 = vmul.f32 %v366, %v366
      %v372 = vmul.f32 %v367, %v367
      %v373 = vmul.f32 %v368, %v368
      %v374 = vsel %vm342, %v369, 0.0
      %375 = vadd.xlane.f32.xlu0 %v374
      %v376 = vpop.xlane.xlu0 %375
      %v377 = vsel %vm342, %v370, 0.0
      %378 = vadd.xlane.f32.xlu0 %v377
      %v379 = vpop.xlane.xlu0 %378
      %v380 = vsel %vm342, %v371, 0.0
      %381 = vadd.xlane.f32.xlu0 %v380
      %v382 = vpop.xlane.xlu0 %381
      %v383 = vsel %vm342, %v372, 0.0
      %384 = vadd.xlane.f32.xlu0 %v383
      %v385 = vpop.xlane.xlu0 %384
      %v386 = vsel %vm342, %v373, 0.0
      %387 = vadd.xlane.f32.xlu0 %v386
      %v388 = vpop.xlane.xlu0 %387
      %v389 = vmul.f32 %v376, %v358
      %v390 = vmul.f32 %v379, %v358
      %v391 = vmul.f32 %v382, %v358
      %v392 = vmul.f32 %v385, %v358
      %v393 = vmul.f32 %v388, %v358
      %v394 = vadd.f32 %v389, 1e-05
      %v395 = vadd.f32 %v390, 1e-05
      %v396 = vadd.f32 %v391, 1e-05
      %v397 = vadd.f32 %v392, 1e-05
      %v398 = vadd.f32 %v393, 1e-05
      %v399 = vrsqrt.pop %v394
      %v400 = vrsqrt.pop %v395
      %v401 = vrsqrt.pop %v396
      %v402 = vrsqrt.pop %v397
      %v403 = vrsqrt.pop %v398
      %v404 = vmul.f32 %v364, %v399
      %v405 = vmul.f32 %v365, %v400
      %v406 = vmul.f32 %v366, %v401
      %v407 = vmul.f32 %v367, %v402
      %v408 = vmul.f32 %v368, %v403
      %v409 = vpack.c.bf16 %v405, %v404
      %v410 = vpack.c.bf16 %v407, %v406
      %v411 = vpack.c.bf16 %v408, %v408
      %v412 = vld [vmem:[%s1] sm:$0xff]
      %v413 = vld [vmem:[%s1 + $0x8] sm:$0xff]
      %v414 = vld [vmem:[%s1 + $0x10] sm:$0xff]
      %v415 = vld [vmem:[%s1 + $0x18] sm:$0xff]
      %v416 = vld [vmem:[%s2] sm:$0x3]
      %v418 = vlaneseq
      %v419 = vshrl.u32 %v418, 7
      %v420 = vsub.s32 0, %v419
      %v421 = vrot.slane %v416, %v420
      %v422 = vlaneseq
      %v423 = vshrl.u32 %v422, 7
      %v424 = vsub.s32 1, %v423
      %v425 = vrot.slane %v416, %v424
      %v432 = vunpack.c.l.b16 %v412
      %v433 = vunpack.c.h.b16 %v412
      %v434 = vunpack.c.l.b16 %v413
      %v435 = vunpack.c.h.b16 %v413
      %v436 = vunpack.c.l.b16 %v414
      %v437 = vunpack.c.h.b16 %v414
      %v438 = vunpack.c.l.b16 %v415
      %v439 = vunpack.c.h.b16 %v415
      %v440 = vpack.c.b16 %v434, %v432
      %v441 = vpack.c.b16 %v435, %v433
      %v442 = vpack.c.b16 %v438, %v436
      %v443 = vpack.c.b16 %v439, %v437
      %v449 = vsel %vm342, %v409, 0
      %v452 = vsel %vm342, %v410, 0
      %v455 = vsel %vm342, %v411, 0
      %457 = vmatprep.subr.bf16.mxu0 0
      %458 = vmatpush1.bf16.msra.mxu0 0
      %459 = vmatprep.subr.bf16.mxu0 0
      %460 = vmatpush1.bf16.msra.mxu0 0
      %461 = vmatprep.subr.bf16.mxu0 0
      %462 = vmatpush1.bf16.msra.mxu0 0
      %463 = vmatprep.subr.bf16.mxu0 0
      %464 = vmatpush1.bf16.msra.mxu0 0
      %465 = vmatprep.subr.bf16.mxu0 0
      %466 = vmatpush1.bf16.msra.mxu0 0
      %467 = vmatprep.subr.bf16.mxu0 0
      %468 = vmatpush1.bf16.msra.mxu0 0
      %469 = vmatprep.subr.bf16.mxu0 %v443
      %470 = vmatpush1.bf16.msra.mxu0 %v442
      %471 = vmatprep.subr.bf16.mxu0 %v441
      %472 = vmatpush1.bf16.msra.mxu0 %v440
      %473 = vmatprep.subr.bf16.mxu0 0
      %474 = vmatpush2.bf16.msra.mxu0 0
      %475 = vmatprep.subr.bf16.mxu0 0
      %476 = vmatpush2.bf16.msra.mxu0 0
      %477 = vmatprep.subr.bf16.mxu0 0
      %478 = vmatpush2.bf16.msra.mxu0 0
      %479 = vmatprep.subr.bf16.mxu0 0
      %480 = vmatpush2.bf16.msra.mxu0 0
      %481 = vmatprep.subr.bf16.mxu0 0
      %482 = vmatpush2.bf16.msra.mxu0 0
      %483 = vmatprep.subr.bf16.mxu0 0
      %484 = vmatpush2.bf16.msra.mxu0 0
      %485 = vmatprep.subr.bf16.mxu0 0
      %486 = vmatpush2.bf16.msra.mxu0 0
      %487 = vmatprep.subr.bf16.mxu0 0
      %488 = vmatpush2.bf16.msra.mxu0 0
      %489 = vmatprep.mubr.bf16.mxu0 0
      %490 = vmatmul.mubr.bf16.gmra.mxu0 %v449
      %v491 = vpop.f32.mrf.mxu0
      %v492 = vadd.f32 %v421, %v491
      %v493 = vpop.f32.mrf.mxu0
      %v494 = vadd.f32 %v425, %v493
      %v495 = vpop.f32.mrf.mxu0
      %v496 = vadd.f32 %v421, %v495
      %v497 = vpop.f32.mrf.mxu0
      %v498 = vadd.f32 %v425, %v497
      %499 = vmatprep.mubr.bf16.mxu0 0
      %500 = vmatmul.mubr.bf16.gmra.mxu0 %v452
      %v501 = vpop.f32.mrf.mxu0
      %v502 = vadd.f32 %v421, %v501
      %v503 = vpop.f32.mrf.mxu0
      %v504 = vadd.f32 %v425, %v503
      %v505 = vpop.f32.mrf.mxu0
      %v506 = vadd.f32 %v421, %v505
      %v507 = vpop.f32.mrf.mxu0
      %v508 = vadd.f32 %v425, %v507
      %509 = vmatprep.mubr.bf16.mxu0 0
      %510 = vmatmul.mubr.bf16.gmra.mxu0 %v455
      %v511 = vpop.f32.mrf.mxu0
      %v512 = vadd.f32 %v421, %v511
      %v513 = vpop.f32.mrf.mxu0
      %v514 = vadd.f32 %v425, %v513
      %v515 = vpop.f32.mrf.mxu0
      %v516 = vpop.f32.mrf.mxu0
      %517 = vdwg.mxu0
      %v518 = vxor.u32 %v494, 2147483648
      %v519 = vxor.u32 %v498, 2147483648
      %v520 = vxor.u32 %v504, 2147483648
      %v521 = vxor.u32 %v508, 2147483648
      %v522 = vxor.u32 %v514, 2147483648
      %v523 = vmul.f32 %v518, 1.442695
      %v524 = vpow.pop %v523
      %v525 = vmul.f32 %v519, 1.442695
      %v526 = vpow.pop %v525
      %v527 = vmul.f32 %v520, 1.442695
      %v528 = vpow.pop %v527
      %v529 = vmul.f32 %v521, 1.442695
      %v530 = vpow.pop %v529
      %v531 = vmul.f32 %v522, 1.442695
      %v532 = vpow.pop %v531
      %v533 = vadd.f32 %v524, 1.0
      %v534 = vadd.f32 %v526, 1.0
      %v535 = vadd.f32 %v528, 1.0
      %v536 = vadd.f32 %v530, 1.0
      %v537 = vadd.f32 %v532, 1.0
      %v538 = vrcp.pop %v533
      %v539 = vmul.f32 1.0, %v538
      %v540 = vrcp.pop %v534
      %v541 = vmul.f32 1.0, %v540
      %v542 = vrcp.pop %v535
      %v543 = vmul.f32 1.0, %v542
      %v544 = vrcp.pop %v536
      %v545 = vmul.f32 1.0, %v544
      %v546 = vrcp.pop %v537
      %v547 = vmul.f32 1.0, %v546
      %v548 = vmul.f32 %v492, %v539
      %v549 = vmul.f32 %v496, %v541
      %v550 = vmul.f32 %v502, %v543
      %v551 = vmul.f32 %v506, %v545
      %v552 = vmul.f32 %v512, %v547
      %v553 = vtanh.pop %v548
      %v554 = vtanh.pop %v549
      %v555 = vtanh.pop %v550
      %v556 = vtanh.pop %v551
      %v557 = vtanh.pop %v552
      %v558 = vpack.c.bf16 %v554, %v553
      %v559 = vpack.c.bf16 %v556, %v555
      %v560 = vpack.c.bf16 %v557, %v557
      %v561 = vld [vmem:[%s3] sm:$0xf]
      %v562 = vld [vmem:[%s3 + $0x4] sm:$0xf]
      %v563 = vld [vmem:[%s3 + $0x8] sm:$0xf]
      %v564 = vld [vmem:[%s3 + $0xc] sm:$0xf]
      %v565 = vld [vmem:[%s3 + $0x10] sm:$0xf]
      %v566 = vld [vmem:[%s3 + $0x14] sm:$0xf]
      %v567 = vld [vmem:[%s3 + $0x18] sm:$0xf]
      %v568 = vld [vmem:[%s3 + $0x1c] sm:$0xf]
      %v569 = vld [vmem:[%s3 + $0x20] sm:$0xf]
      %v570 = vld [vmem:[%s3 + $0x24] sm:$0xf]
      %v571 = vld [vmem:[%s3 + $0x28] sm:$0xf]
      %v572 = vld [vmem:[%s3 + $0x2c] sm:$0xf]
      %v573 = vld [vmem:[%s3 + $0x30] sm:$0xf]
      %v574 = vld [vmem:[%s3 + $0x34] sm:$0xf]
      %v575 = vld [vmem:[%s3 + $0x38] sm:$0xf]
      %v576 = vld [vmem:[%s3 + $0x3c] sm:$0xf]
      %v577 = vld [vmem:[%s4] sm:$0x1]
      %v579 = vlaneseq
      %v580 = vshrl.u32 %v579, 7
      %v581 = vsub.s32 0, %v580
      %v582 = vrot.slane %v577, %v581
      %v600 = vunpack.c.l.b16 %v561
      %v601 = vunpack.c.l.b16 %v562
      %v602 = vunpack.c.l.b16 %v563
      %v603 = vunpack.c.l.b16 %v564
      %v604 = vunpack.c.l.b16 %v565
      %v605 = vunpack.c.l.b16 %v566
      %v606 = vunpack.c.l.b16 %v567
      %v607 = vunpack.c.l.b16 %v568
      %v608 = vunpack.c.l.b16 %v569
      %v609 = vunpack.c.l.b16 %v570
      %v610 = vunpack.c.l.b16 %v571
      %v611 = vunpack.c.l.b16 %v572
      %v612 = vunpack.c.l.b16 %v573
      %v613 = vunpack.c.l.b16 %v574
      %v614 = vunpack.c.l.b16 %v575
      %v615 = vunpack.c.l.b16 %v576
      %v616 = vpack.c.b16 %v601, %v600
      %v617 = vpack.c.b16 %v603, %v602
      %v618 = vpack.c.b16 %v605, %v604
      %v619 = vpack.c.b16 %v607, %v606
      %v620 = vpack.c.b16 %v609, %v608
      %v621 = vpack.c.b16 %v611, %v610
      %v622 = vpack.c.b16 %v613, %v612
      %v623 = vpack.c.b16 %v615, %v614
      %632 = vmatprep.subr.bf16.mxu0 0
      %633 = vmatpush1.bf16.msra.mxu0 %v623
      %634 = vmatprep.subr.bf16.mxu0 0
      %635 = vmatpush1.bf16.msra.mxu0 %v622
      %636 = vmatprep.subr.bf16.mxu0 0
      %637 = vmatpush1.bf16.msra.mxu0 %v621
      %638 = vmatprep.subr.bf16.mxu0 0
      %639 = vmatpush1.bf16.msra.mxu0 %v620
      %640 = vmatprep.subr.bf16.mxu0 0
      %641 = vmatpush1.bf16.msra.mxu0 %v619
      %642 = vmatprep.subr.bf16.mxu0 0
      %643 = vmatpush1.bf16.msra.mxu0 %v618
      %644 = vmatprep.subr.bf16.mxu0 0
      %645 = vmatpush1.bf16.msra.mxu0 %v617
      %646 = vmatprep.subr.bf16.mxu0 0
      %647 = vmatpush1.bf16.msra.mxu0 %v616
      %648 = vmatprep.subr.bf16.mxu0 0
      %649 = vmatpush2.bf16.msra.mxu0 0
      %650 = vmatprep.subr.bf16.mxu0 0
      %651 = vmatpush2.bf16.msra.mxu0 0
      %652 = vmatprep.subr.bf16.mxu0 0
      %653 = vmatpush2.bf16.msra.mxu0 0
      %654 = vmatprep.subr.bf16.mxu0 0
      %655 = vmatpush2.bf16.msra.mxu0 0
      %656 = vmatprep.subr.bf16.mxu0 0
      %657 = vmatpush2.bf16.msra.mxu0 0
      %658 = vmatprep.subr.bf16.mxu0 0
      %659 = vmatpush2.bf16.msra.mxu0 0
      %660 = vmatprep.subr.bf16.mxu0 0
      %661 = vmatpush2.bf16.msra.mxu0 0
      %662 = vmatprep.subr.bf16.mxu0 0
      %663 = vmatpush2.bf16.msra.mxu0 0
      %664 = vmatprep.mubr.bf16.mxu0 0
      %665 = vmatmul.mubr.bf16.gmra.mxu0 %v558
      %v666 = vpop.f32.mrf.mxu0
      %v667 = vadd.f32 %v582, %v666
      %v668 = vpop.f32.mrf.mxu0
      %v669 = vpop.f32.mrf.mxu0
      %v670 = vadd.f32 %v582, %v669
      %v671 = vpop.f32.mrf.mxu0
      %672 = vmatprep.mubr.bf16.mxu0 0
      %673 = vmatmul.mubr.bf16.gmra.mxu0 %v559
      %v674 = vpop.f32.mrf.mxu0
      %v675 = vadd.f32 %v582, %v674
      %v676 = vpop.f32.mrf.mxu0
      %v677 = vpop.f32.mrf.mxu0
      %v678 = vadd.f32 %v582, %v677
      %v679 = vpop.f32.mrf.mxu0
      %680 = vmatprep.mubr.bf16.mxu0 0
      %681 = vmatmul.mubr.bf16.gmra.mxu0 %v560
      %v682 = vpop.f32.mrf.mxu0
      %v683 = vadd.f32 %v582, %v682
      %v684 = vpop.f32.mrf.mxu0
      %v685 = vpop.f32.mrf.mxu0
      %v686 = vpop.f32.mrf.mxu0
      %687 = vdwg.mxu0
      %vm688 = vcmask 31744
      %v689 = vsel %vm688, %v667, -inf
      %690 = vmax.xlane.f32.xlu0 %v689
      %v691 = vpop.xlane.xlu0 %690
      %v692 = vsel %vm688, %v670, -inf
      %693 = vmax.xlane.f32.xlu0 %v692
      %v694 = vpop.xlane.xlu0 %693
      %v695 = vsel %vm688, %v675, -inf
      %696 = vmax.xlane.f32.xlu0 %v695
      %v697 = vpop.xlane.xlu0 %696
      %v698 = vsel %vm688, %v678, -inf
      %699 = vmax.xlane.f32.xlu0 %v698
      %v700 = vpop.xlane.xlu0 %699
      %v701 = vsel %vm688, %v683, -inf
      %702 = vmax.xlane.f32.xlu0 %v701
      %v703 = vpop.xlane.xlu0 %702
      %v704 = vsub.f32 %v667, %v691
      %v705 = vsub.f32 %v670, %v694
      %v706 = vsub.f32 %v675, %v697
      %v707 = vsub.f32 %v678, %v700
      %v708 = vsub.f32 %v683, %v703
      %v709 = vmul.f32 %v704, 1.442695
      %v710 = vpow.pop %v709
      %v711 = vmul.f32 %v705, 1.442695
      %v712 = vpow.pop %v711
      %v713 = vmul.f32 %v706, 1.442695
      %v714 = vpow.pop %v713
      %v715 = vmul.f32 %v707, 1.442695
      %v716 = vpow.pop %v715
      %v717 = vmul.f32 %v708, 1.442695
      %v718 = vpow.pop %v717
      %v719 = vsel %vm688, %v710, 0.0
      %720 = vadd.xlane.f32.xlu0 %v719
      %v721 = vpop.xlane.xlu0 %720
      %v722 = vsel %vm688, %v712, 0.0
      %723 = vadd.xlane.f32.xlu0 %v722
      %v724 = vpop.xlane.xlu0 %723
      %v725 = vsel %vm688, %v714, 0.0
      %726 = vadd.xlane.f32.xlu0 %v725
      %v727 = vpop.xlane.xlu0 %726
      %v728 = vsel %vm688, %v716, 0.0
      %729 = vadd.xlane.f32.xlu0 %v728
      %v730 = vpop.xlane.xlu0 %729
      %v731 = vsel %vm688, %v718, 0.0
      %732 = vadd.xlane.f32.xlu0 %v731
      %v733 = vpop.xlane.xlu0 %732
      %v734 = vrcp.pop %v721
      %v735 = vrcp.pop %v724
      %v736 = vrcp.pop %v727
      %v737 = vrcp.pop %v730
      %v738 = vrcp.pop %v733
      %v739 = vmul.f32 %v710, %v734
      %v740 = vmul.f32 %v712, %v735
      %v741 = vmul.f32 %v714, %v736
      %v742 = vmul.f32 %v716, %v737
      %v743 = vmul.f32 %v718, %v738
      %v744 = vlaneseq
      %v745 = vand.u32 %v744, 127
      %v746 = vsel %vm688, %v739, -inf
      %747 = vmax.xlane.f32.xlu0 %v746
      %v748 = vpop.xlane.xlu0 %747
      %v749 = vsel %vm688, %v740, -inf
      %750 = vmax.xlane.f32.xlu0 %v749
      %v751 = vpop.xlane.xlu0 %750
      %v752 = vsel %vm688, %v741, -inf
      %753 = vmax.xlane.f32.xlu0 %v752
      %v754 = vpop.xlane.xlu0 %753
      %v755 = vsel %vm688, %v742, -inf
      %756 = vmax.xlane.f32.xlu0 %v755
      %v757 = vpop.xlane.xlu0 %756
      %v758 = vsel %vm688, %v743, -inf
      %759 = vmax.xlane.f32.xlu0 %v758
      %v760 = vpop.xlane.xlu0 %759
      %vm761 = vcmp.eq.f32.partialorder %v739, %v748
      %vm762 = vcmp.eq.f32.partialorder %v740, %v751
      %vm763 = vcmp.eq.f32.partialorder %v741, %v754
      %vm764 = vcmp.eq.f32.partialorder %v742, %v757
      %vm765 = vcmp.eq.f32.partialorder %v743, %v760
      %v766 = vsel %vm761, %v745, 4
      %v767 = vsel %vm762, %v745, 4
      %v768 = vsel %vm763, %v745, 4
      %v769 = vsel %vm764, %v745, 4
      %v770 = vsel %vm765, %v745, 4
      %v771 = vsel %vm688, %v766, 2147483647
      %v772 = vand.u32 %v771, 65535
      %v773 = vshra.s32 %v771, 16
      %v774 = vcvt.s32.f32 %v772
      %v775 = vcvt.s32.f32 %v773
      %776 = vmin.xlane.f32.xlu0 %v775
      %v777 = vpop.xlane.xlu0 %776
      %vm778 = vcmp.eq.f32.partialorder %v775, %v777
      %v779 = vsel %vm778, %v774, inf
      %780 = vmin.xlane.f32.xlu0 %v779
      %v781 = vpop.xlane.xlu0 %780
      %v782 = vcvt.f32.s32 %v781
      %v783 = vcvt.f32.s32 %v777
      %v784 = vshll.u32 %v783, 16
      %v785 = vadd.s32 %v784, %v782
      %v786 = vsel %vm688, %v767, 2147483647
      %v787 = vand.u32 %v786, 65535
      %v788 = vshra.s32 %v786, 16
      %v789 = vcvt.s32.f32 %v787
      %v790 = vcvt.s32.f32 %v788
      %791 = vmin.xlane.f32.xlu0 %v790
      %v792 = vpop.xlane.xlu0 %791
      %vm793 = vcmp.eq.f32.partialorder %v790, %v792
      %v794 = vsel %vm793, %v789, inf
      %795 = vmin.xlane.f32.xlu0 %v794
      %v796 = vpop.xlane.xlu0 %795
      %v797 = vcvt.f32.s32 %v796
      %v798 = vcvt.f32.s32 %v792
      %v799 = vshll.u32 %v798, 16
      %v800 = vadd.s32 %v799, %v797
      %v801 = vsel %vm688, %v768, 2147483647
      %v802 = vand.u32 %v801, 65535
      %v803 = vshra.s32 %v801, 16
      %v804 = vcvt.s32.f32 %v802
      %v805 = vcvt.s32.f32 %v803
      %806 = vmin.xlane.f32.xlu0 %v805
      %v807 = vpop.xlane.xlu0 %806
      %vm808 = vcmp.eq.f32.partialorder %v805, %v807
      %v809 = vsel %vm808, %v804, inf
      %810 = vmin.xlane.f32.xlu0 %v809
      %v811 = vpop.xlane.xlu0 %810
      %v812 = vcvt.f32.s32 %v811
      %v813 = vcvt.f32.s32 %v807
      %v814 = vshll.u32 %v813, 16
      %v815 = vadd.s32 %v814, %v812
      %v816 = vsel %vm688, %v769, 2147483647
      %v817 = vand.u32 %v816, 65535
      %v818 = vshra.s32 %v816, 16
      %v819 = vcvt.s32.f32 %v817
      %v820 = vcvt.s32.f32 %v818
      %821 = vmin.xlane.f32.xlu0 %v820
      %v822 = vpop.xlane.xlu0 %821
      %vm823 = vcmp.eq.f32.partialorder %v820, %v822
      %v824 = vsel %vm823, %v819, inf
      %825 = vmin.xlane.f32.xlu0 %v824
      %v826 = vpop.xlane.xlu0 %825
      %v827 = vcvt.f32.s32 %v826
      %v828 = vcvt.f32.s32 %v822
      %v829 = vshll.u32 %v828, 16
      %v830 = vadd.s32 %v829, %v827
      %v831 = vsel %vm688, %v770, 2147483647
      %v832 = vand.u32 %v831, 65535
      %v833 = vshra.s32 %v831, 16
      %v834 = vcvt.s32.f32 %v832
      %v835 = vcvt.s32.f32 %v833
      %836 = vmin.xlane.f32.xlu0 %v835
      %v837 = vpop.xlane.xlu0 %836
      %vm838 = vcmp.eq.f32.partialorder %v835, %v837
      %v839 = vsel %vm838, %v834, inf
      %840 = vmin.xlane.f32.xlu0 %v839
      %v841 = vpop.xlane.xlu0 %840
      %v842 = vcvt.f32.s32 %v841
      %v843 = vcvt.f32.s32 %v837
      %v844 = vshll.u32 %v843, 16
      %v845 = vadd.s32 %v844, %v842
      %vm846 = vcmp.eq.s32.totalorder %v745, %v785
      %vm847 = vcmp.eq.s32.totalorder %v745, %v800
      %vm848 = vcmp.eq.s32.totalorder %v745, %v815
      %vm849 = vcmp.eq.s32.totalorder %v745, %v830
      %vm850 = vcmp.eq.s32.totalorder %v745, %v845
      %v851 = vsel %vm846, 1, 0
      %v852 = vsel %vm847, 1, 0
      %v853 = vsel %vm848, 1, 0
      %v854 = vsel %vm849, 1, 0
      %v855 = vsel %vm850, 1, 0
      %v856 = vcvt.s32.f32 %v851
      %v857 = vcvt.s32.f32 %v852
      %v858 = vcvt.s32.f32 %v853
      %v859 = vcvt.s32.f32 %v854
      %v860 = vcvt.s32.f32 %v855
      %v861 = vadd.f32 %v856, 0.0
      %v862 = vadd.f32 %v857, 0.0
      %v863 = vadd.f32 %v858, 0.0
      %v864 = vadd.f32 %v859, 0.0
      %v865 = vadd.f32 %v860, 0.0
      %vm866 = vcmp.gt.f32.partialorder %v856, 0.0
      %vm867 = vcmp.gt.f32.partialorder %v857, 0.0
      %vm868 = vcmp.gt.f32.partialorder %v858, 0.0
      %vm869 = vcmp.gt.f32.partialorder %v859, 0.0
      %vm870 = vcmp.gt.f32.partialorder %v860, 0.0
      %v871 = vsel %vm866, -inf, %v739
      %v872 = vsel %vm867, -inf, %v740
      %v873 = vsel %vm868, -inf, %v741
      %v874 = vsel %vm869, -inf, %v742
      %v875 = vsel %vm870, -inf, %v743
      %v876 = vsel %vm688, %v871, -inf
      %877 = vmax.xlane.f32.xlu0 %v876
      %v878 = vpop.xlane.xlu0 %877
      %v879 = vsel %vm688, %v872, -inf
      %880 = vmax.xlane.f32.xlu0 %v879
      %v881 = vpop.xlane.xlu0 %880
      %v882 = vsel %vm688, %v873, -inf
      %883 = vmax.xlane.f32.xlu0 %v882
      %v884 = vpop.xlane.xlu0 %883
      %v885 = vsel %vm688, %v874, -inf
      %886 = vmax.xlane.f32.xlu0 %v885
      %v887 = vpop.xlane.xlu0 %886
      %v888 = vsel %vm688, %v875, -inf
      %889 = vmax.xlane.f32.xlu0 %v888
      %v890 = vpop.xlane.xlu0 %889
      %vm891 = vcmp.eq.f32.partialorder %v871, %v878
      %vm892 = vcmp.eq.f32.partialorder %v872, %v881
      %vm893 = vcmp.eq.f32.partialorder %v873, %v884
      %vm894 = vcmp.eq.f32.partialorder %v874, %v887
      %vm895 = vcmp.eq.f32.partialorder %v875, %v890
      %v896 = vsel %vm891, %v745, 4
      %v897 = vsel %vm892, %v745, 4
      %v898 = vsel %vm893, %v745, 4
      %v899 = vsel %vm894, %v745, 4
      %v900 = vsel %vm895, %v745, 4
      %v901 = vsel %vm688, %v896, 2147483647
      %v902 = vand.u32 %v901, 65535
      %v903 = vshra.s32 %v901, 16
      %v904 = vcvt.s32.f32 %v902
      %v905 = vcvt.s32.f32 %v903
      %906 = vmin.xlane.f32.xlu0 %v905
      %v907 = vpop.xlane.xlu0 %906
      %vm908 = vcmp.eq.f32.partialorder %v905, %v907
      %v909 = vsel %vm908, %v904, inf
      %910 = vmin.xlane.f32.xlu0 %v909
      %v911 = vpop.xlane.xlu0 %910
      %v912 = vcvt.f32.s32 %v911
      %v913 = vcvt.f32.s32 %v907
      %v914 = vshll.u32 %v913, 16
      %v915 = vadd.s32 %v914, %v912
      %v916 = vsel %vm688, %v897, 2147483647
      %v917 = vand.u32 %v916, 65535
      %v918 = vshra.s32 %v916, 16
      %v919 = vcvt.s32.f32 %v917
      %v920 = vcvt.s32.f32 %v918
      %921 = vmin.xlane.f32.xlu0 %v920
      %v922 = vpop.xlane.xlu0 %921
      %vm923 = vcmp.eq.f32.partialorder %v920, %v922
      %v924 = vsel %vm923, %v919, inf
      %925 = vmin.xlane.f32.xlu0 %v924
      %v926 = vpop.xlane.xlu0 %925
      %v927 = vcvt.f32.s32 %v926
      %v928 = vcvt.f32.s32 %v922
      %v929 = vshll.u32 %v928, 16
      %v930 = vadd.s32 %v929, %v927
      %v931 = vsel %vm688, %v898, 2147483647
      %v932 = vand.u32 %v931, 65535
      %v933 = vshra.s32 %v931, 16
      %v934 = vcvt.s32.f32 %v932
      %v935 = vcvt.s32.f32 %v933
      %936 = vmin.xlane.f32.xlu0 %v935
      %v937 = vpop.xlane.xlu0 %936
      %vm938 = vcmp.eq.f32.partialorder %v935, %v937
      %v939 = vsel %vm938, %v934, inf
      %940 = vmin.xlane.f32.xlu0 %v939
      %v941 = vpop.xlane.xlu0 %940
      %v942 = vcvt.f32.s32 %v941
      %v943 = vcvt.f32.s32 %v937
      %v944 = vshll.u32 %v943, 16
      %v945 = vadd.s32 %v944, %v942
      %v946 = vsel %vm688, %v899, 2147483647
      %v947 = vand.u32 %v946, 65535
      %v948 = vshra.s32 %v946, 16
      %v949 = vcvt.s32.f32 %v947
      %v950 = vcvt.s32.f32 %v948
      %951 = vmin.xlane.f32.xlu0 %v950
      %v952 = vpop.xlane.xlu0 %951
      %vm953 = vcmp.eq.f32.partialorder %v950, %v952
      %v954 = vsel %vm953, %v949, inf
      %955 = vmin.xlane.f32.xlu0 %v954
      %v956 = vpop.xlane.xlu0 %955
      %v957 = vcvt.f32.s32 %v956
      %v958 = vcvt.f32.s32 %v952
      %v959 = vshll.u32 %v958, 16
      %v960 = vadd.s32 %v959, %v957
      %v961 = vsel %vm688, %v900, 2147483647
      %v962 = vand.u32 %v961, 65535
      %v963 = vshra.s32 %v961, 16
      %v964 = vcvt.s32.f32 %v962
      %v965 = vcvt.s32.f32 %v963
      %966 = vmin.xlane.f32.xlu0 %v965
      %v967 = vpop.xlane.xlu0 %966
      %vm968 = vcmp.eq.f32.partialorder %v965, %v967
      %v969 = vsel %vm968, %v964, inf
      %970 = vmin.xlane.f32.xlu0 %v969
      %v971 = vpop.xlane.xlu0 %970
      %v972 = vcvt.f32.s32 %v971
      %v973 = vcvt.f32.s32 %v967
      %v974 = vshll.u32 %v973, 16
      %v975 = vadd.s32 %v974, %v972
      %vm976 = vcmp.eq.s32.totalorder %v745, %v915
      %vm977 = vcmp.eq.s32.totalorder %v745, %v930
      %vm978 = vcmp.eq.s32.totalorder %v745, %v945
      %vm979 = vcmp.eq.s32.totalorder %v745, %v960
      %vm980 = vcmp.eq.s32.totalorder %v745, %v975
      %v981 = vsel %vm976, 1, 0
      %v982 = vsel %vm977, 1, 0
      %v983 = vsel %vm978, 1, 0
      %v984 = vsel %vm979, 1, 0
      %v985 = vsel %vm980, 1, 0
      %v986 = vcvt.s32.f32 %v981
      %v987 = vcvt.s32.f32 %v982
      %v988 = vcvt.s32.f32 %v983
      %v989 = vcvt.s32.f32 %v984
      %v990 = vcvt.s32.f32 %v985
      %v991 = vadd.f32 %v861, %v986
      %v992 = vadd.f32 %v862, %v987
      %v993 = vadd.f32 %v863, %v988
      %v994 = vadd.f32 %v864, %v989
      %v995 = vadd.f32 %v865, %v990
      %v996 = vsub.f32 %v739, %v748
      %v997 = vsub.f32 %v740, %v751
      %v998 = vsub.f32 %v741, %v754
      %v999 = vsub.f32 %v742, %v757
      %v1000 = vsub.f32 %v743, %v760
      %v1001 = vmul.f32 %v996, 1.442695
      %v1002 = vpow.pop %v1001
      %v1003 = vmul.f32 %v997, 1.442695
      %v1004 = vpow.pop %v1003
      %v1005 = vmul.f32 %v998, 1.442695
      %v1006 = vpow.pop %v1005
      %v1007 = vmul.f32 %v999, 1.442695
      %v1008 = vpow.pop %v1007
      %v1009 = vmul.f32 %v1000, 1.442695
      %v1010 = vpow.pop %v1009
      %v1011 = vmul.f32 %v991, %v1002
      %v1012 = vmul.f32 %v992, %v1004
      %v1013 = vmul.f32 %v993, %v1006
      %v1014 = vmul.f32 %v994, %v1008
      %v1015 = vmul.f32 %v995, %v1010
      %v1016 = vsel %vm688, %v1011, 0.0
      %1017 = vadd.xlane.f32.xlu0 %v1016
      %v1018 = vpop.xlane.xlu0 %1017
      %v1019 = vsel %vm688, %v1012, 0.0
      %1020 = vadd.xlane.f32.xlu0 %v1019
      %v1021 = vpop.xlane.xlu0 %1020
      %v1022 = vsel %vm688, %v1013, 0.0
      %1023 = vadd.xlane.f32.xlu0 %v1022
      %v1024 = vpop.xlane.xlu0 %1023
      %v1025 = vsel %vm688, %v1014, 0.0
      %1026 = vadd.xlane.f32.xlu0 %v1025
      %v1027 = vpop.xlane.xlu0 %1026
      %v1028 = vsel %vm688, %v1015, 0.0
      %1029 = vadd.xlane.f32.xlu0 %v1028
      %v1030 = vpop.xlane.xlu0 %1029
      %v1031 = vrcp.pop %v1018
      %v1032 = vrcp.pop %v1021
      %v1033 = vrcp.pop %v1024
      %v1034 = vrcp.pop %v1027
      %v1035 = vrcp.pop %v1030
      %v1036 = vmul.f32 %v1011, %v1031
      %v1037 = vmul.f32 %v1012, %v1032
      %v1038 = vmul.f32 %v1013, %v1033
      %v1039 = vmul.f32 %v1014, %v1034
      %v1040 = vmul.f32 %v1015, %v1035
      %v1041 = vld [vmem:[%s5] sm:$0xf]
      %v1042 = vld [vmem:[%s5 + $0x4] sm:$0xf]
      %v1043 = vld [vmem:[%s5 + $0x8] sm:$0xf]
      %v1044 = vld [vmem:[%s5 + $0xc] sm:$0xf]
      %v1045 = vld [vmem:[%s6] sm:$0x1]
      %v1047 = vlaneseq
      %v1048 = vshrl.u32 %v1047, 7
      %v1049 = vsub.s32 0, %v1048
      %v1050 = vrot.slane %v1045, %v1049
      %v1056 = vunpack.c.l.b16 %v1041
      %v1057 = vunpack.c.l.b16 %v1042
      %v1058 = vunpack.c.l.b16 %v1043
      %v1059 = vunpack.c.l.b16 %v1044
      %v1060 = vpack.c.b16 %v1057, %v1056
      %v1061 = vpack.c.b16 %v1059, %v1058
      %1064 = vmatprep.subr.bf16.mxu0 0
      %1065 = vmatpush1.bf16.msra.mxu0 0
      %1066 = vmatprep.subr.bf16.mxu0 0
      %1067 = vmatpush1.bf16.msra.mxu0 0
      %1068 = vmatprep.subr.bf16.mxu0 0
      %1069 = vmatpush1.bf16.msra.mxu0 0
      %1070 = vmatprep.subr.bf16.mxu0 0
      %1071 = vmatpush1.bf16.msra.mxu0 0
      %1072 = vmatprep.subr.bf16.mxu0 0
      %1073 = vmatpush1.bf16.msra.mxu0 0
      %1074 = vmatprep.subr.bf16.mxu0 0
      %1075 = vmatpush1.bf16.msra.mxu0 0
      %1076 = vmatprep.subr.bf16.mxu0 0
      %1077 = vmatpush1.bf16.msra.mxu0 %v1061
      %1078 = vmatprep.subr.bf16.mxu0 0
      %1079 = vmatpush1.bf16.msra.mxu0 %v1060
      %1080 = vmatprep.subr.bf16.mxu0 0
      %1081 = vmatpush2.bf16.msra.mxu0 0
      %1082 = vmatprep.subr.bf16.mxu0 0
      %1083 = vmatpush2.bf16.msra.mxu0 0
      %1084 = vmatprep.subr.bf16.mxu0 0
      %1085 = vmatpush2.bf16.msra.mxu0 0
      %1086 = vmatprep.subr.bf16.mxu0 0
      %1087 = vmatpush2.bf16.msra.mxu0 0
      %1088 = vmatprep.subr.bf16.mxu0 0
      %1089 = vmatpush2.bf16.msra.mxu0 0
      %1090 = vmatprep.subr.bf16.mxu0 0
      %1091 = vmatpush2.bf16.msra.mxu0 0
      %1092 = vmatprep.subr.bf16.mxu0 0
      %1093 = vmatpush2.bf16.msra.mxu0 0
      %1094 = vmatprep.subr.bf16.mxu0 0
      %1095 = vmatpush2.bf16.msra.mxu0 0
      %1096 = vmatprep.mubr.bf16.mxu0 0
      %1097 = vmatmul.mubr.bf16.gmra.mxu0 %v449
      %v1098 = vpop.f32.mrf.mxu0
      %v1099 = vadd.f32 %v1050, %v1098
      %v1100 = vpop.f32.mrf.mxu0
      %v1101 = vpop.f32.mrf.mxu0
      %v1102 = vadd.f32 %v1050, %v1101
      %v1103 = vpop.f32.mrf.mxu0
      %1104 = vmatprep.mubr.bf16.mxu0 0
      %1105 = vmatmul.mubr.bf16.gmra.mxu0 %v452
      %v1106 = vpop.f32.mrf.mxu0
      %v1107 = vadd.f32 %v1050, %v1106
      %v1108 = vpop.f32.mrf.mxu0
      %v1109 = vpop.f32.mrf.mxu0
      %v1110 = vadd.f32 %v1050, %v1109
      %v1111 = vpop.f32.mrf.mxu0
      %1112 = vmatprep.mubr.bf16.mxu0 0
      %1113 = vmatmul.mubr.bf16.gmra.mxu0 %v455
      %v1114 = vpop.f32.mrf.mxu0
      %v1115 = vadd.f32 %v1050, %v1114
      %v1116 = vpop.f32.mrf.mxu0
      %v1117 = vpop.f32.mrf.mxu0
      %v1118 = vpop.f32.mrf.mxu0
      %1119 = vdwg.mxu0
      %v1120 = vld [vmem:[%s7] sm:$0xf]
      %v1122 = vsel %vm688, %v1036, 0
      %v1125 = vsel %vm688, %v1037, 0
      %v1128 = vsel %vm688, %v1038, 0
      %v1131 = vsel %vm688, %v1039, 0
      %v1134 = vsel %vm688, %v1040, 0
      %vm1136 = vcmask 1043456
      %v1138 = vsel %vm1136, %v1120, 0
      %1140 = vmatprep.subr.mxu0 0.0
      %1141 = vmatpush1.msra.mxu0 0.0
      %1142 = vmatprep.subr.mxu0 0.0
      %1143 = vmatpush1.msra.mxu0 0.0
      %1144 = vmatprep.subr.mxu0 0.0
      %1145 = vmatpush1.msra.mxu0 0.0
      %1146 = vmatprep.subr.mxu0 0.0
      %1147 = vmatpush1.msra.mxu0 0.0
      %1148 = vmatprep.subr.mxu0 0.0
      %1149 = vmatpush1.msra.mxu0 0.0
      %1150 = vmatprep.subr.mxu0 0.0
      %1151 = vmatpush1.msra.mxu0 0.0
      %1152 = vmatprep.subr.mxu0 0.0
      %1153 = vmatpush1.msra.mxu0 0.0
      %1154 = vmatprep.subr.mxu0 0.0
      %1155 = vmatpush1.msra.mxu0 0.0
      %1156 = vmatprep.subr.mxu0 0.0
      %1157 = vmatpush1.msra.mxu0 0.0
      %1158 = vmatprep.subr.mxu0 0.0
      %1159 = vmatpush1.msra.mxu0 0.0
      %1160 = vmatprep.subr.mxu0 0.0
      %1161 = vmatpush1.msra.mxu0 0.0
      %1162 = vmatprep.subr.mxu0 0.0
      %1163 = vmatpush1.msra.mxu0 0.0
      %1164 = vmatprep.subr.mxu0 0.0
      %1165 = vmatpush1.msra.mxu0 0.0
      %1166 = vmatprep.subr.mxu0 0.0
      %1167 = vmatpush1.msra.mxu0 0.0
      %1168 = vmatprep.subr.mxu0 0.0
      %1169 = vmatpush1.msra.mxu0 0.0
      %1170 = vmatprep.subr.mxu0 0.0
      %1171 = vmatpush1.msra.mxu0 %v1138
      %1172 = vmatprep.subr.mxu0 0.0
      %1173 = vmatpush2.msra.mxu0 0.0
      %1174 = vmatprep.subr.mxu0 0.0
      %1175 = vmatpush2.msra.mxu0 0.0
      %1176 = vmatprep.subr.mxu0 0.0
      %1177 = vmatpush2.msra.mxu0 0.0
      %1178 = vmatprep.subr.mxu0 0.0
      %1179 = vmatpush2.msra.mxu0 0.0
      %1180 = vmatprep.subr.mxu0 0.0
      %1181 = vmatpush2.msra.mxu0 0.0
      %1182 = vmatprep.subr.mxu0 0.0
      %1183 = vmatpush2.msra.mxu0 0.0
      %1184 = vmatprep.subr.mxu0 0.0
      %1185 = vmatpush2.msra.mxu0 0.0
      %1186 = vmatprep.subr.mxu0 0.0
      %1187 = vmatpush2.msra.mxu0 0.0
      %1188 = vmatprep.subr.mxu0 0.0
      %1189 = vmatpush2.msra.mxu0 0.0
      %1190 = vmatprep.subr.mxu0 0.0
      %1191 = vmatpush2.msra.mxu0 0.0
      %1192 = vmatprep.subr.mxu0 0.0
      %1193 = vmatpush2.msra.mxu0 0.0
      %1194 = vmatprep.subr.mxu0 0.0
      %1195 = vmatpush2.msra.mxu0 0.0
      %1196 = vmatprep.subr.mxu0 0.0
      %1197 = vmatpush2.msra.mxu0 0.0
      %1198 = vmatprep.subr.mxu0 0.0
      %1199 = vmatpush2.msra.mxu0 0.0
      %1200 = vmatprep.subr.mxu0 0.0
      %1201 = vmatpush2.msra.mxu0 0.0
      %1202 = vmatprep.subr.mxu0 0.0
      %1203 = vmatpush2.msra.mxu0 0.0
      %1204 = vmatprep.mubr.f32.mxu0 0.0
      %1205 = vmatmul.mubr.f32.gmra.mxu0 %v1122
      %v1206 = vpop.f32.mrf.mxu0
      %v1207 = vadd.f32 0.0, %v1206
      %v1208 = vpop.f32.mrf.mxu0
      %1209 = vmatprep.mubr.f32.mxu0 0.0
      %1210 = vmatmul.mubr.f32.gmra.mxu0 %v1125
      %v1211 = vpop.f32.mrf.mxu0
      %v1212 = vadd.f32 0.0, %v1211
      %v1213 = vpop.f32.mrf.mxu0
      %1214 = vmatprep.mubr.f32.mxu0 0.0
      %1215 = vmatmul.mubr.f32.gmra.mxu0 %v1128
      %v1216 = vpop.f32.mrf.mxu0
      %v1217 = vadd.f32 0.0, %v1216
      %v1218 = vpop.f32.mrf.mxu0
      %1219 = vmatprep.mubr.f32.mxu0 0.0
      %1220 = vmatmul.mubr.f32.gmra.mxu0 %v1131
      %v1221 = vpop.f32.mrf.mxu0
      %v1222 = vadd.f32 0.0, %v1221
      %v1223 = vpop.f32.mrf.mxu0
      %1224 = vmatprep.mubr.f32.mxu0 0.0
      %1225 = vmatmul.mubr.f32.gmra.mxu0 %v1134
      %v1226 = vpop.f32.mrf.mxu0
      %v1227 = vadd.f32 0.0, %v1226
      %v1228 = vpop.f32.mrf.mxu0
      %1229 = vdwg.mxu0
      %v1230 = vmul.f32 %v1099, %v1207
      %v1231 = vmul.f32 %v1102, %v1212
      %v1232 = vmul.f32 %v1107, %v1217
      %v1233 = vmul.f32 %v1110, %v1222
      %v1234 = vmul.f32 %v1115, %v1227
      %v1235 = vld [vmem:[%s8] sm:$0xff]
      %v1236 = vld [vmem:[%s8 + $0x8] sm:$0xff]
      %v1237 = vld [vmem:[%s8 + $0x10] sm:$0xff]
      %v1238 = vld [vmem:[%s8 + $0x18] sm:$0xff]
      %v1239 = vld [vmem:[%s8 + $0x20] sm:$0xff]
      %v1240 = vld [vmem:[%s8 + $0x28] sm:$0xff]
      %v1241 = vld [vmem:[%s8 + $0x30] sm:$0xff]
      %v1242 = vld [vmem:[%s8 + $0x38] sm:$0xff]
      %v1243 = vld [vmem:[%s8 + $0x40] sm:$0xff]
      %v1244 = vld [vmem:[%s8 + $0x48] sm:$0xff]
      %v1245 = vld [vmem:[%s8 + $0x50] sm:$0xff]
      %v1246 = vld [vmem:[%s8 + $0x58] sm:$0xff]
      %v1247 = vld [vmem:[%s8 + $0x60] sm:$0xff]
      %v1248 = vld [vmem:[%s8 + $0x68] sm:$0xff]
      %v1249 = vld [vmem:[%s8 + $0x70] sm:$0xff]
      %v1250 = vld [vmem:[%s8 + $0x78] sm:$0xff]
      %1251 = vmatprep.subr.mxu0 0.0
      %1252 = vmatpush1.msra.mxu0 %v1250
      %1253 = vmatprep.subr.mxu0 0.0
      %1254 = vmatpush1.msra.mxu0 %v1249
      %1255 = vmatprep.subr.mxu0 0.0
      %1256 = vmatpush1.msra.mxu0 %v1248
      %1257 = vmatprep.subr.mxu0 0.0
      %1258 = vmatpush1.msra.mxu0 %v1247
      %1259 = vmatprep.subr.mxu0 0.0
      %1260 = vmatpush1.msra.mxu0 %v1246
      %1261 = vmatprep.subr.mxu0 0.0
      %1262 = vmatpush1.msra.mxu0 %v1245
      %1263 = vmatprep.subr.mxu0 0.0
      %1264 = vmatpush1.msra.mxu0 %v1244
      %1265 = vmatprep.subr.mxu0 0.0
      %1266 = vmatpush1.msra.mxu0 %v1243
      %1267 = vmatprep.subr.mxu0 0.0
      %1268 = vmatpush1.msra.mxu0 %v1242
      %1269 = vmatprep.subr.mxu0 0.0
      %1270 = vmatpush1.msra.mxu0 %v1241
      %1271 = vmatprep.subr.mxu0 0.0
      %1272 = vmatpush1.msra.mxu0 %v1240
      %1273 = vmatprep.subr.mxu0 0.0
      %1274 = vmatpush1.msra.mxu0 %v1239
      %1275 = vmatprep.subr.mxu0 0.0
      %1276 = vmatpush1.msra.mxu0 %v1238
      %1277 = vmatprep.subr.mxu0 0.0
      %1278 = vmatpush1.msra.mxu0 %v1237
      %1279 = vmatprep.subr.mxu0 0.0
      %1280 = vmatpush1.msra.mxu0 %v1236
      %1281 = vmatprep.subr.mxu0 0.0
      %1282 = vmatpush1.msra.mxu0 %v1235
      %1283 = vmatprep.subr.mxu0 0.0
      %1284 = vmatpush2.msra.mxu0 0.0
      %1285 = vmatprep.subr.mxu0 0.0
      %1286 = vmatpush2.msra.mxu0 0.0
      %1287 = vmatprep.subr.mxu0 0.0
      %1288 = vmatpush2.msra.mxu0 0.0
      %1289 = vmatprep.subr.mxu0 0.0
      %1290 = vmatpush2.msra.mxu0 0.0
      %1291 = vmatprep.subr.mxu0 0.0
      %1292 = vmatpush2.msra.mxu0 0.0
      %1293 = vmatprep.subr.mxu0 0.0
      %1294 = vmatpush2.msra.mxu0 0.0
      %1295 = vmatprep.subr.mxu0 0.0
      %1296 = vmatpush2.msra.mxu0 0.0
      %1297 = vmatprep.subr.mxu0 0.0
      %1298 = vmatpush2.msra.mxu0 0.0
      %1299 = vmatprep.subr.mxu0 0.0
      %1300 = vmatpush2.msra.mxu0 0.0
      %1301 = vmatprep.subr.mxu0 0.0
      %1302 = vmatpush2.msra.mxu0 0.0
      %1303 = vmatprep.subr.mxu0 0.0
      %1304 = vmatpush2.msra.mxu0 0.0
      %1305 = vmatprep.subr.mxu0 0.0
      %1306 = vmatpush2.msra.mxu0 0.0
      %1307 = vmatprep.subr.mxu0 0.0
      %1308 = vmatpush2.msra.mxu0 0.0
      %1309 = vmatprep.subr.mxu0 0.0
      %1310 = vmatpush2.msra.mxu0 0.0
      %1311 = vmatprep.subr.mxu0 0.0
      %1312 = vmatpush2.msra.mxu0 0.0
      %1313 = vmatprep.subr.mxu0 0.0
      %1314 = vmatpush2.msra.mxu0 0.0
      %1315 = vmatprep.mubr.f32.mxu0 0.0
      %1316 = vmatmul.mubr.f32.gmra.mxu0 %v1230
      %v1317 = vpop.f32.mrf.mxu0
      %v1318 = vadd.f32 0.0, %v1317
      %v1319 = vpop.f32.mrf.mxu0
      %1320 = vmatprep.mubr.f32.mxu0 0.0
      %1321 = vmatmul.mubr.f32.gmra.mxu0 %v1231
      %v1322 = vpop.f32.mrf.mxu0
      %v1323 = vadd.f32 0.0, %v1322
      %v1324 = vpop.f32.mrf.mxu0
      %1325 = vmatprep.mubr.f32.mxu0 0.0
      %1326 = vmatmul.mubr.f32.gmra.mxu0 %v1232
      %v1327 = vpop.f32.mrf.mxu0
      %v1328 = vadd.f32 0.0, %v1327
      %v1329 = vpop.f32.mrf.mxu0
      %1330 = vmatprep.mubr.f32.mxu0 0.0
      %1331 = vmatmul.mubr.f32.gmra.mxu0 %v1233
      %v1332 = vpop.f32.mrf.mxu0
      %v1333 = vadd.f32 0.0, %v1332
      %v1334 = vpop.f32.mrf.mxu0
      %1335 = vmatprep.mubr.f32.mxu0 0.0
      %1336 = vmatmul.mubr.f32.gmra.mxu0 %v1234
      %v1337 = vpop.f32.mrf.mxu0
      %v1338 = vadd.f32 0.0, %v1337
      %v1339 = vpop.f32.mrf.mxu0
      %1340 = vdwg.mxu0
      %1341 = vst.msk [vmem:[%s334] sm:$0xff] %vm342, %v1318
      %1342 = vst.msk [vmem:[%s334 + $0x8] sm:$0xff] %vm342, %v1323
      %1343 = vst.msk [vmem:[%s334 + $0x10] sm:$0xff] %vm342, %v1328
      %1344 = vst.msk [vmem:[%s334 + $0x18] sm:$0xff] %vm342, %v1333
      %1345 = vst.msk [vmem:[%s334 + $0x20] sm:$0xff] %vm342, %v1338
      %s1346 = smul.u32 5, %s20
      %p1347 = scmp.lt.s32.totalorder %s1346, 9
      %s1348 = scalar_select %p1347, %s1346, 9
      %s1349 = smul.addr %s1348, 8
      %s1350 = scalar_lea.vmem %s9, %s1349
      // Predicated region
      $region57: #{tpu_custom_call.1} parent=55 // pred_check
        %p1351 = pneg %p232
      $region58: #{tpu_custom_call.1} parent=55 // pred_check_branch
        %1353 = sbr.rel (%p1351) target = $region60
      $region59: #{tpu_custom_call.1} parent=55 // pred_region
        %s1354 = smul.u32 5, %s20
      $region60: #{tpu_custom_call.1} parent=55 // pred_fallthru
        _
    $region56: #{tpu_custom_call.1} parent=5 // pred_fallthru
      _
    %p1355 = scmp.le.s32.totalorder 2, %s15
    // Predicated region
    $region61: #{tpu_custom_call.1} parent=5 // pred_check
      %p1356 = pneg %p1355
    $region62: #{tpu_custom_call.1} parent=5 // pred_check_branch
      %1358 = sbr.rel (%p1356) target = $region64
    $region63: #{tpu_custom_call.1} parent=5 // pred_region
      %s1359 = ssub.s32 %s15, 2
      // Predicated region
      $region65: #{tpu_custom_call.1} parent=63 // pred_check
        %p1360 = pneg %p238
      $region66: #{tpu_custom_call.1} parent=63 // pred_check_branch
        %1362 = sbr.rel (%p1360) target = $region68
      $region67: #{tpu_custom_call.1} parent=63 // pred_region
        %s1363 = smul.u32 5, %s21
        %p1364 = scmp.lt.s32.totalorder %s1363, 9
        %s1365 = scalar_select %p1364, %s1363, 9
        %s1366 = smul.addr %s1365, 8
        %s1367 = scalar_lea.vmem %s9, %s1366
      $region68: #{tpu_custom_call.1} parent=63 // pred_fallthru
        _
    $region64: #{tpu_custom_call.1} parent=5 // pred_fallthru
      _
  $region6: #{tpu_custom_call.1} parent=0 // loop_footer
    %s19 = sadd.s32 1, %s15
  $region7: #{tpu_custom_call.1} parent=0 // loop_footer_branch
    %14 = sbr.rel target = $region3
  $region8: #{tpu_custom_call.1} parent=0 // loop_exit
    _

</llo_original>
